<compile_context>
chip_gen: v7x
topology: tpu7x:2x2x1
jax: 0.10.0
libtpu: 0.0.40
codegen_flags: <defaults>
</compile_context>

<pallas_src>
import functools

import jax
import jax.numpy as jnp
from jax.experimental import pallas as pl
from jax.experimental.pallas import tpu as pltpu


def _round_up(v, m):
    return ((v + m - 1) // m) * m


def _pad2d(a, rows, cols):
    r, c = a.shape
    return jnp.pad(a, ((0, rows - r), (0, cols - c)))


@functools.lru_cache(maxsize=1)
def _vmem_limit_bytes():
    """~75% of physical per-core VMEM (leaves headroom for compiler scratch)."""
    cap = None
    try:
        cap = int(pltpu.get_tpu_info().vmem_capacity_bytes)
    except Exception:
        cap = None
    if not cap:
        cap = 64 * 1024 * 1024  # conservative fallback (v7x physical per-TC)
    return (cap * 3) // 4


# --------------------------------------------------------------------------
# Kernels
# --------------------------------------------------------------------------
def _project_kernel(x_ref, w_ref, out_ref):
    # support = x @ W  (one row tile per grid step; W is VMEM-resident).
    out_ref[...] = jnp.dot(
        x_ref[...], w_ref[...], preferred_element_type=jnp.float32
    ).astype(out_ref.dtype)


def _propagate_kernel(adj_ref, sup_ref, out_ref, acc_ref, *, tile_k, apply_relu):
    # out[i] = [relu](sum_k adj[i, k] @ support[k]); f32 accumulator scratch.
    k = pl.program_id(1)

    @pl.when(k == 0)
    def _():
        acc_ref[...] = jnp.zeros_like(acc_ref)

    sup_blk = sup_ref[pl.ds(pl.multiple_of(k * tile_k, tile_k), tile_k), :]
    acc_ref[...] += jnp.dot(adj_ref[...], sup_blk, preferred_element_type=jnp.float32)

    @pl.when(k == pl.num_programs(1) - 1)
    def _():
        res = acc_ref[...]
        if apply_relu:
            res = jnp.maximum(res, 0.0)
        out_ref[...] = res.astype(out_ref.dtype)


def _decoder_kernel(z_ref, out_ref, *, tile):
    # out[i, j] = sigmoid(z_i @ z_j.T); z is fully VMEM-resident, no re-DMA.
    i = pl.program_id(0)
    j = pl.program_id(1)
    zi = z_ref[pl.ds(pl.multiple_of(i * tile, tile), tile), :]
    zj = z_ref[pl.ds(pl.multiple_of(j * tile, tile), tile), :]
    # Contraction over the last dim of both operands -> MXU consumes the
    # transposed RHS directly, no vxpose pass.
    logits = jax.lax.dot_general(
        zi, zj,
        dimension_numbers=(((1,), (1,)), ((), ())),
        preferred_element_type=jnp.float32,
    )
    out_ref[...] = jax.nn.sigmoid(logits)


# --------------------------------------------------------------------------
# pallas_call wrappers
# --------------------------------------------------------------------------
def _project(x_pad, w_pad, *, tile, out_dtype, vmem_limit):
    n_p, f_p = x_pad.shape
    c_p = w_pad.shape[1]
    return pl.pallas_call(
        _project_kernel,
        out_shape=jax.ShapeDtypeStruct((n_p, c_p), out_dtype),
        grid=(n_p // tile,),
        in_specs=[
            pl.BlockSpec((tile, f_p), lambda i: (i, 0)),          # x row tiles
            pl.BlockSpec(memory_space=pltpu.MemorySpace.VMEM),    # W resident
        ],
        out_specs=pl.BlockSpec((tile, c_p), lambda i: (i, 0)),
        compiler_params=pltpu.CompilerParams(
            dimension_semantics=("parallel",),
            vmem_limit_bytes=vmem_limit,
        ),
    )(x_pad, w_pad)


def _propagate(adj_pad, sup, *, tile, apply_relu, out_dtype, vmem_limit):
    n_p = adj_pad.shape[0]
    c_p = sup.shape[1]
    return pl.pallas_call(
        functools.partial(_propagate_kernel, tile_k=tile, apply_relu=apply_relu),
        out_shape=jax.ShapeDtypeStruct((n_p, c_p), out_dtype),
        grid=(n_p // tile, n_p // tile),
        in_specs=[
            pl.BlockSpec((tile, tile), lambda i, k: (i, k)),      # adj tiles
            pl.BlockSpec(memory_space=pltpu.MemorySpace.VMEM),    # support resident
        ],
        out_specs=pl.BlockSpec((tile, c_p), lambda i, k: (i, 0)),
        scratch_shapes=[pltpu.VMEM((tile, c_p), jnp.float32)],
        compiler_params=pltpu.CompilerParams(
            dimension_semantics=("parallel", "arbitrary"),
            vmem_limit_bytes=vmem_limit,
        ),
    )(adj_pad, sup)


def _decode(z_pad, *, tile, vmem_limit):
    n_p = z_pad.shape[0]
    return pl.pallas_call(
        functools.partial(_decoder_kernel, tile=tile),
        out_shape=jax.ShapeDtypeStruct((n_p, n_p), jnp.float32),
        grid=(n_p // tile, n_p // tile),
        in_specs=[pl.BlockSpec(memory_space=pltpu.MemorySpace.VMEM)],  # z resident
        out_specs=pl.BlockSpec((tile, tile), lambda i, j: (i, j)),
        compiler_params=pltpu.CompilerParams(
            dimension_semantics=("parallel", "parallel"),
            vmem_limit_bytes=vmem_limit,
        ),
    )(z_pad)


@functools.partial(jax.jit, static_argnames=("tile", "matmul_dtype"))
def gae_forward(x, adj, w1, w2, *, tile=256, matmul_dtype=jnp.float32):
    n, f_in = x.shape
    h = w1.shape[1]
    dim_z = w2.shape[1]
    assert adj.shape == (n, n)
    assert w1.shape[0] == f_in and w2.shape[0] == h

    # Zero-pad: lane dims to multiples of 128, N to a multiple of the tile.
    n_p = _round_up(n, tile)
    f_p = _round_up(f_in, 128)
    h_p = _round_up(h, 128)
    z_p = _round_up(dim_z, 128)

    cd = matmul_dtype  # MXU operand dtype; accumulation is always f32.
    # Cast on the wrapper (HBM) side so the bf16 path halves DMA traffic too.
    x_pad = _pad2d(x.astype(cd), n_p, f_p)
    adj_pad = _pad2d(adj.astype(cd), n_p, n_p)
    w1_pad = _pad2d(w1.astype(cd), f_p, h_p)
    w2_pad = _pad2d(w2.astype(cd), h_p, z_p)

    vmem_limit = _vmem_limit_bytes()

    # gcn_layer1: hidden = relu(adj @ (x @ W1))
    sup1 = _project(x_pad, w1_pad, tile=tile, out_dtype=cd, vmem_limit=vmem_limit)
    hidden = _propagate(adj_pad, sup1, tile=tile, apply_relu=True,
                        out_dtype=cd, vmem_limit=vmem_limit)

    # gcn_layer2 (identity activation): z = adj @ (hidden @ W2)
    sup2 = _project(hidden, w2_pad, tile=tile, out_dtype=cd, vmem_limit=vmem_limit)
    z = _propagate(adj_pad, sup2, tile=tile, apply_relu=False,
                   out_dtype=cd, vmem_limit=vmem_limit)

    # inner-product decoder: adj_hat = sigmoid(z @ z.T), f32 output to match
    # the module (bf16 output would halve the dominant HBM write if tolerated).
    adj_hat_pad = _decode(z, tile=tile, vmem_limit=vmem_limit)
    return adj_hat_pad[:n, :n]


def xavier_normal(key, fan_in, fan_out):
    # matches torch.nn.init.xavier_normal_ : std = sqrt(2 / (fan_in + fan_out))
    std = (2.0 / (fan_in + fan_out)) ** 0.5
    return std * jax.random.normal(key, (fan_in, fan_out), dtype=jnp.float32)


def reference_forward(x, adj, w1, w2):
    hidden = jnp.maximum(adj @ (x @ w1), 0.0)
    z = adj @ (hidden @ w2)
    return jax.nn.sigmoid(z @ z.T)


if __name__ == "__main__":
    # Small deterministic problem: N nodes, F_in features, H hidden, Z latent.
    N, F_IN, H, Z = 64, 32, 32, 16

    key = jax.random.PRNGKey(0)
    k_x, k_adj, k_w1, k_w2 = jax.random.split(key, 4)

    x = jax.random.normal(k_x, (N, F_IN), dtype=jnp.float32)

    # symmetric, row-normalized adjacency (deterministic)
    a_raw = (jax.random.uniform(k_adj, (N, N)) < 0.1).astype(jnp.float32)
    a_sym = jnp.maximum(a_raw, a_raw.T) + jnp.eye(N, dtype=jnp.float32)
    deg = jnp.sum(a_sym, axis=1, keepdims=True)
    adj = a_sym / deg

    w1 = xavier_normal(k_w1, F_IN, H)
    w2 = xavier_normal(k_w2, H, Z)

    ref = reference_forward(x, adj, w1, w2)

    # f32 path (matches the PyTorch module's float32 semantics).
    adj_hat = jax.block_until_ready(gae_forward(x, adj, w1, w2))
    assert adj_hat.shape == (N, N)
    assert jnp.allclose(adj_hat, ref, atol=1e-5, rtol=1e-5)

    # bf16-operand fast path (f32 MXU accumulation): looser tolerance.
    adj_hat_bf16 = jax.block_until_ready(
        gae_forward(x, adj, w1, w2, matmul_dtype=jnp.bfloat16)
    )
    assert adj_hat_bf16.shape == (N, N)
    assert jnp.allclose(adj_hat_bf16, ref, atol=5e-2, rtol=0.0)

    print("KERNEL_OK")
</pallas_src>

<mosaic_0001>
module attributes {stable_mosaic.version = 11 : i64} {
  func.func @_project_kernel(%arg0: i32, %arg1: memref<256x128xf32, #tpu.memory_space<vmem>>, %arg2: memref<128x128xf32, #tpu.memory_space<vmem>>, %arg3: memref<256x128xf32, #tpu.memory_space<vmem>>) attributes {dimension_semantics = [#tpu.dimension_semantics<parallel>], iteration_bounds = array<i64: 1>, scalar_prefetch = 0 : i64, scratch_operands = 0 : i64, tpu.core_type = #tpu.core_type<tc>, window_params = [{transform_indices = @transform_0, window_bounds = array<i64: 256, 128>}, {pipeline_mode = #tpu.pipeline_mode<synchronous>, transform_indices = @transform_1, window_bounds = array<i64: 128, 128>}, {transform_indices = @transform_2, window_bounds = array<i64: 256, 128>}]} {
    %c0 = arith.constant 0 : index
    %c0_0 = arith.constant 0 : index
    %0 = vector.load %arg1[%c0, %c0_0] : memref<256x128xf32, #tpu.memory_space<vmem>>, vector<256x128xf32>
    %c0_1 = arith.constant 0 : index
    %c0_2 = arith.constant 0 : index
    %1 = vector.load %arg2[%c0_1, %c0_2] : memref<128x128xf32, #tpu.memory_space<vmem>>, vector<128x128xf32>
    %cst = arith.constant dense<0.000000e+00> : vector<256x128xf32>
    %2 = tpu.matmul %0, %1, %cst {dimension_numbers = #tpu.dot_dimension_numbers<[1], [0], [0], [1], [0, 0, 1, 1], [], []>} : vector<256x128xf32>, vector<128x128xf32>, vector<256x128xf32> -> vector<256x128xf32>
    %c0_3 = arith.constant 0 : index
    %c0_4 = arith.constant 0 : index
    %3 = vector.load %arg3[%c0_3, %c0_4] : memref<256x128xf32, #tpu.memory_space<vmem>>, vector<256x128xf32>
    tpu.vector_store %arg3[%c0_3, %c0_4], %2 {strides = array<i32>} : memref<256x128xf32, #tpu.memory_space<vmem>>, vector<256x128xf32>,
    return
  }
  func.func @transform_0(%arg0: i32) -> (i32, i32) {
    %c0_i32 = arith.constant 0 : i32
    %c0_i32_0 = arith.constant 0 : i32
    return %arg0, %c0_i32 : i32, i32
  }
  func.func @transform_1(%arg0: i32) -> (i32, i32) {
    %c0_i32 = arith.constant 0 : i32
    %c0_i32_0 = arith.constant 0 : i32
    %c0_i32_1 = arith.constant 0 : i32
    return %c0_i32, %c0_i32_0 : i32, i32
  }
  func.func @transform_2(%arg0: i32) -> (i32, i32) {
    %c0_i32 = arith.constant 0 : i32
    %c0_i32_0 = arith.constant 0 : i32
    return %arg0, %c0_i32 : i32, i32
  }
}

module attributes {stable_mosaic.version = 11 : i64} {
  func.func @_propagate_kernel(%arg0: i32, %arg1: i32, %arg2: memref<256x256xf32, #tpu.memory_space<vmem>>, %arg3: memref<256x128xf32, #tpu.memory_space<vmem>>, %arg4: memref<256x128xf32, #tpu.memory_space<vmem>>, %arg5: memref<256x128xf32, #tpu.memory_space<vmem>>) attributes {dimension_semantics = [#tpu.dimension_semantics<parallel>, #tpu.dimension_semantics<arbitrary>], iteration_bounds = array<i64: 1, 1>, scalar_prefetch = 0 : i64, scratch_operands = 1 : i64, tpu.core_type = #tpu.core_type<tc>, window_params = [{transform_indices = @transform_0, window_bounds = array<i64: 256, 256>}, {pipeline_mode = #tpu.pipeline_mode<synchronous>, transform_indices = @transform_1, window_bounds = array<i64: 256, 128>}, {transform_indices = @transform_2, window_bounds = array<i64: 256, 128>}]} {
    %c0_i32 = arith.constant 0 : i32
    %0 = arith.cmpi eq, %arg1, %c0_i32 : i32
    %1 = arith.extui %0 : i1 to i32
    %c0_i32_0 = arith.constant 0 : i32
    %2 = arith.cmpi ne, %1, %c0_i32_0 : i32
    scf.if %2 {
      %cst_9 = arith.constant 0.000000e+00 : f32
      %15 = vector.broadcast %cst_9 : f32 to vector<256x128xf32>
      %c0_10 = arith.constant 0 : index
      %c0_11 = arith.constant 0 : index
      %16 = vector.load %arg5[%c0_10, %c0_11] : memref<256x128xf32, #tpu.memory_space<vmem>>, vector<256x128xf32>
      tpu.vector_store %arg5[%c0_10, %c0_11], %15 {strides = array<i32>} : memref<256x128xf32, #tpu.memory_space<vmem>>, vector<256x128xf32>,
    } else {
    }
    %c256_i32 = arith.constant 256 : i32
    %3 = arith.muli %arg1, %c256_i32 : i32
    %4 = tpu.assume_multiple %3, 256 : i32
    %5 = arith.index_cast %4 : i32 to index
    %c0 = arith.constant 0 : index
    %6 = vector.load %arg3[%5, %c0] : memref<256x128xf32, #tpu.memory_space<vmem>>, vector<256x128xf32>
    %c0_1 = arith.constant 0 : index
    %c0_2 = arith.constant 0 : index
    %7 = vector.load %arg5[%c0_1, %c0_2] : memref<256x128xf32, #tpu.memory_space<vmem>>, vector<256x128xf32>
    %c0_3 = arith.constant 0 : index
    %c0_4 = arith.constant 0 : index
    %8 = vector.load %arg2[%c0_3, %c0_4] : memref<256x256xf32, #tpu.memory_space<vmem>>, vector<256x256xf32>
    %cst = arith.constant dense<0.000000e+00> : vector<256x128xf32>
    %9 = tpu.matmul %8, %6, %cst {dimension_numbers = #tpu.dot_dimension_numbers<[1], [0], [0], [1], [0, 0, 1, 1], [], []>} : vector<256x256xf32>, vector<256x128xf32>, vector<256x128xf32> -> vector<256x128xf32>
    %10 = arith.addf %7, %9 : vector<256x128xf32>
    %c0_5 = arith.constant 0 : index
    %c0_6 = arith.constant 0 : index
    %11 = vector.load %arg5[%c0_5, %c0_6] : memref<256x128xf32, #tpu.memory_space<vmem>>, vector<256x128xf32>
    tpu.vector_store %arg5[%c0_5, %c0_6], %10 {strides = array<i32>} : memref<256x128xf32, #tpu.memory_space<vmem>>, vector<256x128xf32>,
    %c0_i32_7 = arith.constant 0 : i32
    %12 = arith.cmpi eq, %arg1, %c0_i32_7 : i32
    %13 = arith.extui %12 : i1 to i32
    %c0_i32_8 = arith.constant 0 : i32
    %14 = arith.cmpi ne, %13, %c0_i32_8 : i32
    scf.if %14 {
      %c0_9 = arith.constant 0 : index
      %c0_10 = arith.constant 0 : index
      %15 = vector.load %arg5[%c0_9, %c0_10] : memref<256x128xf32, #tpu.memory_space<vmem>>, vector<256x128xf32>
      %cst_11 = arith.constant 0.000000e+00 : f32
      %16 = vector.broadcast %cst_11 : f32 to vector<256x128xf32>
      %17 = arith.maximumf %15, %16 : vector<256x128xf32>
      %c0_12 = arith.constant 0 : index
      %c0_13 = arith.constant 0 : index
      %18 = vector.load %arg4[%c0_12, %c0_13] : memref<256x128xf32, #tpu.memory_space<vmem>>, vector<256x128xf32>
      tpu.vector_store %arg4[%c0_12, %c0_13], %17 {strides = array<i32>} : memref<256x128xf32, #tpu.memory_space<vmem>>, vector<256x128xf32>,
    } else {
    }
    return
  }
  func.func @transform_0(%arg0: i32, %arg1: i32) -> (i32, i32) {
    %c0_i32 = arith.constant 0 : i32
    return %arg0, %arg1 : i32, i32
  }
  func.func @transform_1(%arg0: i32, %arg1: i32) -> (i32, i32) {
    %c0_i32 = arith.constant 0 : i32
    %c0_i32_0 = arith.constant 0 : i32
    %c0_i32_1 = arith.constant 0 : i32
    return %c0_i32, %c0_i32_0 : i32, i32
  }
  func.func @transform_2(%arg0: i32, %arg1: i32) -> (i32, i32) {
    %c0_i32 = arith.constant 0 : i32
    %c0_i32_0 = arith.constant 0 : i32
    return %arg0, %c0_i32 : i32, i32
  }
}

module attributes {stable_mosaic.version = 11 : i64} {
  func.func @_propagate_kernel(%arg0: i32, %arg1: i32, %arg2: memref<256x256xf32, #tpu.memory_space<vmem>>, %arg3: memref<256x128xf32, #tpu.memory_space<vmem>>, %arg4: memref<256x128xf32, #tpu.memory_space<vmem>>, %arg5: memref<256x128xf32, #tpu.memory_space<vmem>>) attributes {dimension_semantics = [#tpu.dimension_semantics<parallel>, #tpu.dimension_semantics<arbitrary>], iteration_bounds = array<i64: 1, 1>, scalar_prefetch = 0 : i64, scratch_operands = 1 : i64, tpu.core_type = #tpu.core_type<tc>, window_params = [{transform_indices = @transform_0, window_bounds = array<i64: 256, 256>}, {pipeline_mode = #tpu.pipeline_mode<synchronous>, transform_indices = @transform_1, window_bounds = array<i64: 256, 128>}, {transform_indices = @transform_2, window_bounds = array<i64: 256, 128>}]} {
    %c0_i32 = arith.constant 0 : i32
    %0 = arith.cmpi eq, %arg1, %c0_i32 : i32
    %1 = arith.extui %0 : i1 to i32
    %c0_i32_0 = arith.constant 0 : i32
    %2 = arith.cmpi ne, %1, %c0_i32_0 : i32
    scf.if %2 {
      %cst_9 = arith.constant 0.000000e+00 : f32
      %15 = vector.broadcast %cst_9 : f32 to vector<256x128xf32>
      %c0_10 = arith.constant 0 : index
      %c0_11 = arith.constant 0 : index
      %16 = vector.load %arg5[%c0_10, %c0_11] : memref<256x128xf32, #tpu.memory_space<vmem>>, vector<256x128xf32>
      tpu.vector_store %arg5[%c0_10, %c0_11], %15 {strides = array<i32>} : memref<256x128xf32, #tpu.memory_space<vmem>>, vector<256x128xf32>,
    } else {
    }
    %c256_i32 = arith.constant 256 : i32
    %3 = arith.muli %arg1, %c256_i32 : i32
    %4 = tpu.assume_multiple %3, 256 : i32
    %5 = arith.index_cast %4 : i32 to index
    %c0 = arith.constant 0 : index
    %6 = vector.load %arg3[%5, %c0] : memref<256x128xf32, #tpu.memory_space<vmem>>, vector<256x128xf32>
    %c0_1 = arith.constant 0 : index
    %c0_2 = arith.constant 0 : index
    %7 = vector.load %arg5[%c0_1, %c0_2] : memref<256x128xf32, #tpu.memory_space<vmem>>, vector<256x128xf32>
    %c0_3 = arith.constant 0 : index
    %c0_4 = arith.constant 0 : index
    %8 = vector.load %arg2[%c0_3, %c0_4] : memref<256x256xf32, #tpu.memory_space<vmem>>, vector<256x256xf32>
    %cst = arith.constant dense<0.000000e+00> : vector<256x128xf32>
    %9 = tpu.matmul %8, %6, %cst {dimension_numbers = #tpu.dot_dimension_numbers<[1], [0], [0], [1], [0, 0, 1, 1], [], []>} : vector<256x256xf32>, vector<256x128xf32>, vector<256x128xf32> -> vector<256x128xf32>
    %10 = arith.addf %7, %9 : vector<256x128xf32>
    %c0_5 = arith.constant 0 : index
    %c0_6 = arith.constant 0 : index
    %11 = vector.load %arg5[%c0_5, %c0_6] : memref<256x128xf32, #tpu.memory_space<vmem>>, vector<256x128xf32>
    tpu.vector_store %arg5[%c0_5, %c0_6], %10 {strides = array<i32>} : memref<256x128xf32, #tpu.memory_space<vmem>>, vector<256x128xf32>,
    %c0_i32_7 = arith.constant 0 : i32
    %12 = arith.cmpi eq, %arg1, %c0_i32_7 : i32
    %13 = arith.extui %12 : i1 to i32
    %c0_i32_8 = arith.constant 0 : i32
    %14 = arith.cmpi ne, %13, %c0_i32_8 : i32
    scf.if %14 {
      %c0_9 = arith.constant 0 : index
      %c0_10 = arith.constant 0 : index
      %15 = vector.load %arg5[%c0_9, %c0_10] : memref<256x128xf32, #tpu.memory_space<vmem>>, vector<256x128xf32>
      %c0_11 = arith.constant 0 : index
      %c0_12 = arith.constant 0 : index
      %16 = vector.load %arg4[%c0_11, %c0_12] : memref<256x128xf32, #tpu.memory_space<vmem>>, vector<256x128xf32>
      tpu.vector_store %arg4[%c0_11, %c0_12], %15 {strides = array<i32>} : memref<256x128xf32, #tpu.memory_space<vmem>>, vector<256x128xf32>,
    } else {
    }
    return
  }
  func.func @transform_0(%arg0: i32, %arg1: i32) -> (i32, i32) {
    %c0_i32 = arith.constant 0 : i32
    return %arg0, %arg1 : i32, i32
  }
  func.func @transform_1(%arg0: i32, %arg1: i32) -> (i32, i32) {
    %c0_i32 = arith.constant 0 : i32
    %c0_i32_0 = arith.constant 0 : i32
    %c0_i32_1 = arith.constant 0 : i32
    return %c0_i32, %c0_i32_0 : i32, i32
  }
  func.func @transform_2(%arg0: i32, %arg1: i32) -> (i32, i32) {
    %c0_i32 = arith.constant 0 : i32
    %c0_i32_0 = arith.constant 0 : i32
    return %arg0, %c0_i32 : i32, i32
  }
}

module attributes {stable_mosaic.version = 11 : i64} {
  func.func @_decoder_kernel(%arg0: i32, %arg1: i32, %arg2: memref<256x128xf32, #tpu.memory_space<vmem>>, %arg3: memref<256x256xf32, #tpu.memory_space<vmem>>) attributes {dimension_semantics = [#tpu.dimension_semantics<parallel>, #tpu.dimension_semantics<parallel>], iteration_bounds = array<i64: 1, 1>, scalar_prefetch = 0 : i64, scratch_operands = 0 : i64, tpu.core_type = #tpu.core_type<tc>, window_params = [{pipeline_mode = #tpu.pipeline_mode<synchronous>, transform_indices = @transform_0, window_bounds = array<i64: 256, 128>}, {transform_indices = @transform_1, window_bounds = array<i64: 256, 256>}]} {
    %c256_i32 = arith.constant 256 : i32
    %0 = arith.muli %arg0, %c256_i32 : i32
    %1 = tpu.assume_multiple %0, 256 : i32
    %2 = arith.index_cast %1 : i32 to index
    %c0 = arith.constant 0 : index
    %3 = vector.load %arg2[%2, %c0] : memref<256x128xf32, #tpu.memory_space<vmem>>, vector<256x128xf32>
    %c256_i32_0 = arith.constant 256 : i32
    %4 = arith.muli %arg1, %c256_i32_0 : i32
    %5 = tpu.assume_multiple %4, 256 : i32
    %6 = arith.index_cast %5 : i32 to index
    %c0_1 = arith.constant 0 : index
    %7 = vector.load %arg2[%6, %c0_1] : memref<256x128xf32, #tpu.memory_space<vmem>>, vector<256x128xf32>
    %cst = arith.constant dense<0.000000e+00> : vector<256x256xf32>
    %8 = tpu.matmul %3, %7, %cst {dimension_numbers = #tpu.dot_dimension_numbers<[1], [1], [0], [0], [0, 0, 1, 0], [], []>} : vector<256x128xf32>, vector<256x128xf32>, vector<256x256xf32> -> vector<256x256xf32>
    %9 = arith.negf %8 : vector<256x256xf32>
    %10 = math.exp %9 : vector<256x256xf32>
    %cst_2 = arith.constant 1.000000e+00 : f32
    %11 = vector.broadcast %cst_2 : f32 to vector<256x256xf32>
    %12 = arith.addf %11, %10 : vector<256x256xf32>
    %13 = arith.divf %11, %12 : vector<256x256xf32>
    %c0_3 = arith.constant 0 : index
    %c0_4 = arith.constant 0 : index
    %14 = vector.load %arg3[%c0_3, %c0_4] : memref<256x256xf32, #tpu.memory_space<vmem>>, vector<256x256xf32>
    tpu.vector_store %arg3[%c0_3, %c0_4], %13 {strides = array<i32>} : memref<256x256xf32, #tpu.memory_space<vmem>>, vector<256x256xf32>,
    return
  }
  func.func @transform_0(%arg0: i32, %arg1: i32) -> (i32, i32) {
    %c0_i32 = arith.constant 0 : i32
    %c0_i32_0 = arith.constant 0 : i32
    %c0_i32_1 = arith.constant 0 : i32
    return %c0_i32, %c0_i32_0 : i32, i32
  }
  func.func @transform_1(%arg0: i32, %arg1: i32) -> (i32, i32) {
    %c0_i32 = arith.constant 0 : i32
    return %arg0, %arg1 : i32, i32
  }
}

</mosaic_0001>

<llo_original>
// kernel: gae_forward.5
$region0: #{gae_forward.5}
  #allocation0 [shape = 'u32[]', space=smem, size = 0x4, offset = 0x4, fixed_abs, tag = 'smem constant byte address 0x4 - core index']
  #allocation1 [shape = 'u32[144,128]{1,0:T(1,128)}', space=vmem, size = 0x12000, scoped, tag = 'internal scratch']
  %s0 = inlined_call_operand.vmem [shape: f32[256,128], index: 0, kind: input, shape index: {}]
  %s1 = inlined_call_operand.vmem [shape: f32[128,128], index: 1, kind: input, shape index: {}]
  %s2 = inlined_call_operand.vmem [shape: f32[256,128], index: 2, kind: output, shape index: {}]
  %s3 = sld [smem:[#allocation0]]
  $region18: #{gae_forward.5} parent=0
    _
  %s5 = ssub.s32 1, %s3
  %s6 = scalar_select 0, %s5, %s3
  // Predicated region
  $region2: #{gae_forward.5} parent=0 // pred_check
    _
  $region3: #{gae_forward.5} parent=0 // pred_check_branch
    %8 = sbr.rel (0) target = $region5
  $region4: #{gae_forward.5} parent=0 // pred_region
    _
  $region5: #{gae_forward.5} parent=0 // pred_fallthru
    _
  // Predicated region
  $region6: #{gae_forward.5} parent=0 // pred_check
    _
  $region7: #{gae_forward.5} parent=0 // pred_check_branch
    %10 = sbr.rel (0) target = $region9
  $region8: #{gae_forward.5} parent=0 // pred_region
    _
  $region9: #{gae_forward.5} parent=0 // pred_fallthru
    _
  %v11 = vld [vmem:[%s0] sm:$0xff]
  %v12 = vld [vmem:[%s0 + $0x8] sm:$0xff]
  %v13 = vld [vmem:[%s0 + $0x10] sm:$0xff]
  %v14 = vld [vmem:[%s0 + $0x18] sm:$0xff]
  %v15 = vld [vmem:[%s0 + $0x20] sm:$0xff]
  %v16 = vld [vmem:[%s0 + $0x28] sm:$0xff]
  %v17 = vld [vmem:[%s0 + $0x30] sm:$0xff]
  %v18 = vld [vmem:[%s0 + $0x38] sm:$0xff]
  %v19 = vld [vmem:[%s0 + $0x40] sm:$0xff]
  %v20 = vld [vmem:[%s0 + $0x48] sm:$0xff]
  %v21 = vld [vmem:[%s0 + $0x50] sm:$0xff]
  %v22 = vld [vmem:[%s0 + $0x58] sm:$0xff]
  %v23 = vld [vmem:[%s0 + $0x60] sm:$0xff]
  %v24 = vld [vmem:[%s0 + $0x68] sm:$0xff]
  %v25 = vld [vmem:[%s0 + $0x70] sm:$0xff]
  %v26 = vld [vmem:[%s0 + $0x78] sm:$0xff]
  %v27 = vld [vmem:[%s0 + $0x80] sm:$0xff]
  %v28 = vld [vmem:[%s0 + $0x88] sm:$0xff]
  %v29 = vld [vmem:[%s0 + $0x90] sm:$0xff]
  %v30 = vld [vmem:[%s0 + $0x98] sm:$0xff]
  %v31 = vld [vmem:[%s0 + $0xa0] sm:$0xff]
  %v32 = vld [vmem:[%s0 + $0xa8] sm:$0xff]
  %v33 = vld [vmem:[%s0 + $0xb0] sm:$0xff]
  %v34 = vld [vmem:[%s0 + $0xb8] sm:$0xff]
  %v35 = vld [vmem:[%s0 + $0xc0] sm:$0xff]
  %v36 = vld [vmem:[%s0 + $0xc8] sm:$0xff]
  %v37 = vld [vmem:[%s0 + $0xd0] sm:$0xff]
  %v38 = vld [vmem:[%s0 + $0xd8] sm:$0xff]
  %v39 = vld [vmem:[%s0 + $0xe0] sm:$0xff]
  %v40 = vld [vmem:[%s0 + $0xe8] sm:$0xff]
  %v41 = vld [vmem:[%s0 + $0xf0] sm:$0xff]
  %v42 = vld [vmem:[%s0 + $0xf8] sm:$0xff]
  %v43 = vld [vmem:[%s1] sm:$0xff]
  %v44 = vld [vmem:[%s1 + $0x8] sm:$0xff]
  %v45 = vld [vmem:[%s1 + $0x10] sm:$0xff]
  %v46 = vld [vmem:[%s1 + $0x18] sm:$0xff]
  %v47 = vld [vmem:[%s1 + $0x20] sm:$0xff]
  %v48 = vld [vmem:[%s1 + $0x28] sm:$0xff]
  %v49 = vld [vmem:[%s1 + $0x30] sm:$0xff]
  %v50 = vld [vmem:[%s1 + $0x38] sm:$0xff]
  %v51 = vld [vmem:[%s1 + $0x40] sm:$0xff]
  %v52 = vld [vmem:[%s1 + $0x48] sm:$0xff]
  %v53 = vld [vmem:[%s1 + $0x50] sm:$0xff]
  %v54 = vld [vmem:[%s1 + $0x58] sm:$0xff]
  %v55 = vld [vmem:[%s1 + $0x60] sm:$0xff]
  %v56 = vld [vmem:[%s1 + $0x68] sm:$0xff]
  %v57 = vld [vmem:[%s1 + $0x70] sm:$0xff]
  %v58 = vld [vmem:[%s1 + $0x78] sm:$0xff]
  %59 = vmatprep.subr.mxu0 0.0
  %60 = vmatpush1.msra.mxu0 %v43
  %61 = vmatprep.subr.mxu0 0.0
  %62 = vmatpush1.msra.mxu0 %v44
  %63 = vmatprep.subr.mxu0 0.0
  %64 = vmatpush1.msra.mxu0 %v45
  %65 = vmatprep.subr.mxu0 0.0
  %66 = vmatpush1.msra.mxu0 %v46
  %67 = vmatprep.subr.mxu0 0.0
  %68 = vmatpush1.msra.mxu0 %v47
  %69 = vmatprep.subr.mxu0 0.0
  %70 = vmatpush1.msra.mxu0 %v48
  %71 = vmatprep.subr.mxu0 0.0
  %72 = vmatpush1.msra.mxu0 %v49
  %73 = vmatprep.subr.mxu0 0.0
  %74 = vmatpush1.msra.mxu0 %v50
  %75 = vmatprep.subr.mxu0 0.0
  %76 = vmatpush1.msra.mxu0 %v51
  %77 = vmatprep.subr.mxu0 0.0
  %78 = vmatpush1.msra.mxu0 %v52
  %79 = vmatprep.subr.mxu0 0.0
  %80 = vmatpush1.msra.mxu0 %v53
  %81 = vmatprep.subr.mxu0 0.0
  %82 = vmatpush1.msra.mxu0 %v54
  %83 = vmatprep.subr.mxu0 0.0
  %84 = vmatpush1.msra.mxu0 %v55
  %85 = vmatprep.subr.mxu0 0.0
  %86 = vmatpush1.msra.mxu0 %v56
  %87 = vmatprep.subr.mxu0 0.0
  %88 = vmatpush1.msra.mxu0 %v57
  %89 = vmatprep.subr.mxu0 0.0
  %90 = vmatpush1.msra.mxu0 %v58
  %91 = vmatprep.subr.mxu0 0.0
  %92 = vmatpush1.msra.mxu0 0.0
  %93 = vmatprep.subr.mxu0 0.0
  %94 = vmatpush1.msra.mxu0 0.0
  %95 = vmatprep.subr.mxu0 0.0
  %96 = vmatpush1.msra.mxu0 0.0
  %97 = vmatprep.subr.mxu0 0.0
  %98 = vmatpush1.msra.mxu0 0.0
  %99 = vmatprep.subr.mxu0 0.0
  %100 = vmatpush1.msra.mxu0 0.0
  %101 = vmatprep.subr.mxu0 0.0
  %102 = vmatpush1.msra.mxu0 0.0
  %103 = vmatprep.subr.mxu0 0.0
  %104 = vmatpush1.msra.mxu0 0.0
  %105 = vmatprep.subr.mxu0 0.0
  %106 = vmatpush1.msra.mxu0 0.0
  %107 = vmatprep.subr.mxu0 0.0
  %108 = vmatpush1.msra.mxu0 0.0
  %109 = vmatprep.subr.mxu0 0.0
  %110 = vmatpush1.msra.mxu0 0.0
  %111 = vmatprep.subr.mxu0 0.0
  %112 = vmatpush1.msra.mxu0 0.0
  %113 = vmatprep.subr.mxu0 0.0
  %114 = vmatpush1.msra.mxu0 0.0
  %115 = vmatprep.subr.mxu0 0.0
  %116 = vmatpush1.msra.mxu0 0.0
  %117 = vmatprep.subr.mxu0 0.0
  %118 = vmatpush1.msra.mxu0 0.0
  %119 = vmatprep.subr.mxu0 0.0
  %120 = vmatpush1.msra.mxu0 0.0
  %121 = vmatprep.subr.mxu0 0.0
  %122 = vmatpush1.msra.mxu0 0.0
  %123 = vmatprep.mubr.f32.mxu0 0.0
  %124 = vmatmul.mubr.f32.gmra.mrb[0].mxu0 %v11
  %v125 = vpop.f32.mrb[0].mxu0
  %v126 = vadd.f32 0.0, %v125
  %v127 = vpop.f32.mrb[0].mxu0
  %128 = vmatprep.mubr.f32.mxu0 0.0
  %129 = vmatmul.mubr.f32.gmra.mrb[0].mxu0 %v12
  %v130 = vpop.f32.mrb[0].mxu0
  %v131 = vadd.f32 0.0, %v130
  %v132 = vpop.f32.mrb[0].mxu0
  %133 = vmatprep.mubr.f32.mxu0 0.0
  %134 = vmatmul.mubr.f32.gmra.mrb[0].mxu0 %v13
  %v135 = vpop.f32.mrb[0].mxu0
  %v136 = vadd.f32 0.0, %v135
  %v137 = vpop.f32.mrb[0].mxu0
  %138 = vmatprep.mubr.f32.mxu0 0.0
  %139 = vmatmul.mubr.f32.gmra.mrb[0].mxu0 %v14
  %v140 = vpop.f32.mrb[0].mxu0
  %v141 = vadd.f32 0.0, %v140
  %v142 = vpop.f32.mrb[0].mxu0
  %143 = vmatprep.mubr.f32.mxu0 0.0
  %144 = vmatmul.mubr.f32.gmra.mrb[0].mxu0 %v15
  %v145 = vpop.f32.mrb[0].mxu0
  %v146 = vadd.f32 0.0, %v145
  %v147 = vpop.f32.mrb[0].mxu0
  %148 = vmatprep.mubr.f32.mxu0 0.0
  %149 = vmatmul.mubr.f32.gmra.mrb[0].mxu0 %v16
  %v150 = vpop.f32.mrb[0].mxu0
  %v151 = vadd.f32 0.0, %v150
  %v152 = vpop.f32.mrb[0].mxu0
  %153 = vmatprep.mubr.f32.mxu0 0.0
  %154 = vmatmul.mubr.f32.gmra.mrb[0].mxu0 %v17
  %v155 = vpop.f32.mrb[0].mxu0
  %v156 = vadd.f32 0.0, %v155
  %v157 = vpop.f32.mrb[0].mxu0
  %158 = vmatprep.mubr.f32.mxu0 0.0
  %159 = vmatmul.mubr.f32.gmra.mrb[0].mxu0 %v18
  %v160 = vpop.f32.mrb[0].mxu0
  %v161 = vadd.f32 0.0, %v160
  %v162 = vpop.f32.mrb[0].mxu0
  %163 = vmatprep.mubr.f32.mxu0 0.0
  %164 = vmatmul.mubr.f32.gmra.mrb[0].mxu0 %v19
  %v165 = vpop.f32.mrb[0].mxu0
  %v166 = vadd.f32 0.0, %v165
  %v167 = vpop.f32.mrb[0].mxu0
  %168 = vmatprep.mubr.f32.mxu0 0.0
  %169 = vmatmul.mubr.f32.gmra.mrb[0].mxu0 %v20
  %v170 = vpop.f32.mrb[0].mxu0
  %v171 = vadd.f32 0.0, %v170
  %v172 = vpop.f32.mrb[0].mxu0
  %173 = vmatprep.mubr.f32.mxu0 0.0
  %174 = vmatmul.mubr.f32.gmra.mrb[0].mxu0 %v21
  %v175 = vpop.f32.mrb[0].mxu0
  %v176 = vadd.f32 0.0, %v175
  %v177 = vpop.f32.mrb[0].mxu0
  %178 = vmatprep.mubr.f32.mxu0 0.0
  %179 = vmatmul.mubr.f32.gmra.mrb[0].mxu0 %v22
  %v180 = vpop.f32.mrb[0].mxu0
  %v181 = vadd.f32 0.0, %v180
  %v182 = vpop.f32.mrb[0].mxu0
  %183 = vmatprep.mubr.f32.mxu0 0.0
  %184 = vmatmul.mubr.f32.gmra.mrb[0].mxu0 %v23
  %v185 = vpop.f32.mrb[0].mxu0
  %v186 = vadd.f32 0.0, %v185
  %v187 = vpop.f32.mrb[0].mxu0
  %188 = vmatprep.mubr.f32.mxu0 0.0
  %189 = vmatmul.mubr.f32.gmra.mrb[0].mxu0 %v24
  %v190 = vpop.f32.mrb[0].mxu0
  %v191 = vadd.f32 0.0, %v190
  %v192 = vpop.f32.mrb[0].mxu0
  %193 = vmatprep.mubr.f32.mxu0 0.0
  %194 = vmatmul.mubr.f32.gmra.mrb[0].mxu0 %v25
  %v195 = vpop.f32.mrb[0].mxu0
  %v196 = vadd.f32 0.0, %v195
  %v197 = vpop.f32.mrb[0].mxu0
  %198 = vmatprep.mubr.f32.mxu0 0.0
  %199 = vmatmul.mubr.f32.gmra.mrb[0].mxu0 %v26
  %v200 = vpop.f32.mrb[0].mxu0
  %v201 = vadd.f32 0.0, %v200
  %v202 = vpop.f32.mrb[0].mxu0
  %203 = vmatprep.mubr.f32.mxu0 0.0
  %204 = vmatmul.mubr.f32.gmra.mrb[0].mxu0 %v27
  %v205 = vpop.f32.mrb[0].mxu0
  %v206 = vadd.f32 0.0, %v205
  %v207 = vpop.f32.mrb[0].mxu0
  %208 = vmatprep.mubr.f32.mxu0 0.0
  %209 = vmatmul.mubr.f32.gmra.mrb[0].mxu0 %v28
  %v210 = vpop.f32.mrb[0].mxu0
  %v211 = vadd.f32 0.0, %v210
  %v212 = vpop.f32.mrb[0].mxu0
  %213 = vmatprep.mubr.f32.mxu0 0.0
  %214 = vmatmul.mubr.f32.gmra.mrb[0].mxu0 %v29
  %v215 = vpop.f32.mrb[0].mxu0
  %v216 = vadd.f32 0.0, %v215
  %v217 = vpop.f32.mrb[0].mxu0
  %218 = vmatprep.mubr.f32.mxu0 0.0
  %219 = vmatmul.mubr.f32.gmra.mrb[0].mxu0 %v30
  %v220 = vpop.f32.mrb[0].mxu0
  %v221 = vadd.f32 0.0, %v220
  %v222 = vpop.f32.mrb[0].mxu0
  %223 = vmatprep.mubr.f32.mxu0 0.0
  %224 = vmatmul.mubr.f32.gmra.mrb[0].mxu0 %v31
  %v225 = vpop.f32.mrb[0].mxu0
  %v226 = vadd.f32 0.0, %v225
  %v227 = vpop.f32.mrb[0].mxu0
  %228 = vmatprep.mubr.f32.mxu0 0.0
  %229 = vmatmul.mubr.f32.gmra.mrb[0].mxu0 %v32
  %v230 = vpop.f32.mrb[0].mxu0
  %v231 = vadd.f32 0.0, %v230
  %v232 = vpop.f32.mrb[0].mxu0
  %233 = vmatprep.mubr.f32.mxu0 0.0
  %234 = vmatmul.mubr.f32.gmra.mrb[0].mxu0 %v33
  %v235 = vpop.f32.mrb[0].mxu0
  %v236 = vadd.f32 0.0, %v235
  %v237 = vpop.f32.mrb[0].mxu0
  %238 = vmatprep.mubr.f32.mxu0 0.0
  %239 = vmatmul.mubr.f32.gmra.mrb[0].mxu0 %v34
  %v240 = vpop.f32.mrb[0].mxu0
  %v241 = vadd.f32 0.0, %v240
  %v242 = vpop.f32.mrb[0].mxu0
  %243 = vmatprep.mubr.f32.mxu0 0.0
  %244 = vmatmul.mubr.f32.gmra.mrb[0].mxu0 %v35
  %v245 = vpop.f32.mrb[0].mxu0
  %v246 = vadd.f32 0.0, %v245
  %v247 = vpop.f32.mrb[0].mxu0
  %248 = vmatprep.mubr.f32.mxu0 0.0
  %249 = vmatmul.mubr.f32.gmra.mrb[0].mxu0 %v36
  %v250 = vpop.f32.mrb[0].mxu0
  %v251 = vadd.f32 0.0, %v250
  %v252 = vpop.f32.mrb[0].mxu0
  %253 = vmatprep.mubr.f32.mxu0 0.0
  %254 = vmatmul.mubr.f32.gmra.mrb[0].mxu0 %v37
  %v255 = vpop.f32.mrb[0].mxu0
  %v256 = vadd.f32 0.0, %v255
  %v257 = vpop.f32.mrb[0].mxu0
  %258 = vmatprep.mubr.f32.mxu0 0.0
  %259 = vmatmul.mubr.f32.gmra.mrb[0].mxu0 %v38
  %v260 = vpop.f32.mrb[0].mxu0
  %v261 = vadd.f32 0.0, %v260
  %v262 = vpop.f32.mrb[0].mxu0
  %263 = vmatprep.mubr.f32.mxu0 0.0
  %264 = vmatmul.mubr.f32.gmra.mrb[0].mxu0 %v39
  %v265 = vpop.f32.mrb[0].mxu0
  %v266 = vadd.f32 0.0, %v265
  %v267 = vpop.f32.mrb[0].mxu0
  %268 = vmatprep.mubr.f32.mxu0 0.0
  %269 = vmatmul.mubr.f32.gmra.mrb[0].mxu0 %v40
  %v270 = vpop.f32.mrb[0].mxu0
  %v271 = vadd.f32 0.0, %v270
  %v272 = vpop.f32.mrb[0].mxu0
  %273 = vmatprep.mubr.f32.mxu0 0.0
  %274 = vmatmul.mubr.f32.gmra.mrb[0].mxu0 %v41
  %v275 = vpop.f32.mrb[0].mxu0
  %v276 = vadd.f32 0.0, %v275
  %v277 = vpop.f32.mrb[0].mxu0
  %278 = vmatprep.mubr.f32.mxu0 0.0
  %279 = vmatmul.mubr.f32.gmra.mrb[0].mxu0 %v42
  %v280 = vpop.f32.mrb[0].mxu0
  %v281 = vadd.f32 0.0, %v280
  %v282 = vpop.f32.mrb[0].mxu0
  %283 = vdwg.mxu0
  %284 = vst [vmem:[%s2] sm:$0xff] %v126
  %285 = vst [vmem:[%s2 + $0x8] sm:$0xff] %v131
  %286 = vst [vmem:[%s2 + $0x10] sm:$0xff] %v136
  %287 = vst [vmem:[%s2 + $0x18] sm:$0xff] %v141
  %288 = vst [vmem:[%s2 + $0x20] sm:$0xff] %v146
  %289 = vst [vmem:[%s2 + $0x28] sm:$0xff] %v151
  %290 = vst [vmem:[%s2 + $0x30] sm:$0xff] %v156
  %291 = vst [vmem:[%s2 + $0x38] sm:$0xff] %v161
  %292 = vst [vmem:[%s2 + $0x40] sm:$0xff] %v166
  %293 = vst [vmem:[%s2 + $0x48] sm:$0xff] %v171
  %294 = vst [vmem:[%s2 + $0x50] sm:$0xff] %v176
  %295 = vst [vmem:[%s2 + $0x58] sm:$0xff] %v181
  %296 = vst [vmem:[%s2 + $0x60] sm:$0xff] %v186
  %297 = vst [vmem:[%s2 + $0x68] sm:$0xff] %v191
  %298 = vst [vmem:[%s2 + $0x70] sm:$0xff] %v196
  %299 = vst [vmem:[%s2 + $0x78] sm:$0xff] %v201
  %300 = vst [vmem:[%s2 + $0x80] sm:$0xff] %v206
  %301 = vst [vmem:[%s2 + $0x88] sm:$0xff] %v211
  %302 = vst [vmem:[%s2 + $0x90] sm:$0xff] %v216
  %303 = vst [vmem:[%s2 + $0x98] sm:$0xff] %v221
  %304 = vst [vmem:[%s2 + $0xa0] sm:$0xff] %v226
  %305 = vst [vmem:[%s2 + $0xa8] sm:$0xff] %v231
  %306 = vst [vmem:[%s2 + $0xb0] sm:$0xff] %v236
  %307 = vst [vmem:[%s2 + $0xb8] sm:$0xff] %v241
  %308 = vst [vmem:[%s2 + $0xc0] sm:$0xff] %v246
  %309 = vst [vmem:[%s2 + $0xc8] sm:$0xff] %v251
  %310 = vst [vmem:[%s2 + $0xd0] sm:$0xff] %v256
  %311 = vst [vmem:[%s2 + $0xd8] sm:$0xff] %v261
  %312 = vst [vmem:[%s2 + $0xe0] sm:$0xff] %v266
  %313 = vst [vmem:[%s2 + $0xe8] sm:$0xff] %v271
  %314 = vst [vmem:[%s2 + $0xf0] sm:$0xff] %v276
  %315 = vst [vmem:[%s2 + $0xf8] sm:$0xff] %v281
  // Predicated region
  $region10: #{gae_forward.5} parent=0 // pred_check
    _
  $region11: #{gae_forward.5} parent=0 // pred_check_branch
    %317 = sbr.rel (0) target = $region13
  $region12: #{gae_forward.5} parent=0 // pred_region
    _
  $region13: #{gae_forward.5} parent=0 // pred_fallthru
    _
  // Predicated region
  $region14: #{gae_forward.5} parent=0 // pred_check
    _
  $region15: #{gae_forward.5} parent=0 // pred_check_branch
    %319 = sbr.rel (0) target = $region17
  $region16: #{gae_forward.5} parent=0 // pred_region
    _
  $region17: #{gae_forward.5} parent=0 // pred_fallthru
    _

// kernel: gae_forward.6
$region0: #{gae_forward.6}
  #allocation0 [shape = 'u32[]', space=smem, size = 0x4, offset = 0x4, fixed_abs, tag = 'smem constant byte address 0x4 - core index']
  #allocation1 [shape = 'u32[144,128]{1,0:T(1,128)}', space=vmem, size = 0x12000, scoped, tag = 'internal scratch']
  #allocation2 [shape = 'f32[256,128]{1,0:T(8,128)}', space=vmem, size = 0x20000, scoped, tag = 'scratch operand']
  %s0 = inlined_call_operand.vmem [shape: f32[256,256], index: 0, kind: input, shape index: {}]
  %s1 = inlined_call_operand.vmem [shape: f32[256,128], index: 1, kind: input, shape index: {}]
  %s2 = inlined_call_operand.vmem [shape: f32[256,128], index: 2, kind: output, shape index: {}]
  %s3 = sld [smem:[#allocation0]]
  $region26: #{gae_forward.6} parent=0
    _
  %s5 = ssub.s32 1, %s3
  %s6 = scalar_select 0, %s5, %s3
  // Predicated region
  $region2: #{gae_forward.6} parent=0 // pred_check
    _
  $region3: #{gae_forward.6} parent=0 // pred_check_branch
    %8 = sbr.rel (0) target = $region5
  $region4: #{gae_forward.6} parent=0 // pred_region
    _
  $region5: #{gae_forward.6} parent=0 // pred_fallthru
    _
  // Predicated region
  $region6: #{gae_forward.6} parent=0 // pred_check
    _
  $region7: #{gae_forward.6} parent=0 // pred_check_branch
    %10 = sbr.rel (0) target = $region9
  $region8: #{gae_forward.6} parent=0 // pred_region
    _
  $region9: #{gae_forward.6} parent=0 // pred_fallthru
    _
  %p11 = scmp.eq.s32.totalorder 0, 0
  // Predicated region
  $region10: #{gae_forward.6} parent=0 // pred_check
    %p12 = pneg %p11
  $region11: #{gae_forward.6} parent=0 // pred_check_branch
    %14 = sbr.rel (%p12) target = $region13
  $region12: #{gae_forward.6} parent=0 // pred_region
    %15 = vst [vmem:[#allocation2] sm:$0xff] 0.0
    %16 = vst [vmem:[#allocation2 + $0x8] sm:$0xff] 0.0
    %17 = vst [vmem:[#allocation2 + $0x10] sm:$0xff] 0.0
    %18 = vst [vmem:[#allocation2 + $0x18] sm:$0xff] 0.0
    %19 = vst [vmem:[#allocation2 + $0x20] sm:$0xff] 0.0
    %20 = vst [vmem:[#allocation2 + $0x28] sm:$0xff] 0.0
    %21 = vst [vmem:[#allocation2 + $0x30] sm:$0xff] 0.0
    %22 = vst [vmem:[#allocation2 + $0x38] sm:$0xff] 0.0
    %23 = vst [vmem:[#allocation2 + $0x40] sm:$0xff] 0.0
    %24 = vst [vmem:[#allocation2 + $0x48] sm:$0xff] 0.0
    %25 = vst [vmem:[#allocation2 + $0x50] sm:$0xff] 0.0
    %26 = vst [vmem:[#allocation2 + $0x58] sm:$0xff] 0.0
    %27 = vst [vmem:[#allocation2 + $0x60] sm:$0xff] 0.0
    %28 = vst [vmem:[#allocation2 + $0x68] sm:$0xff] 0.0
    %29 = vst [vmem:[#allocation2 + $0x70] sm:$0xff] 0.0
    %30 = vst [vmem:[#allocation2 + $0x78] sm:$0xff] 0.0
    %31 = vst [vmem:[#allocation2 + $0x80] sm:$0xff] 0.0
    %32 = vst [vmem:[#allocation2 + $0x88] sm:$0xff] 0.0
    %33 = vst [vmem:[#allocation2 + $0x90] sm:$0xff] 0.0
    %34 = vst [vmem:[#allocation2 + $0x98] sm:$0xff] 0.0
    %35 = vst [vmem:[#allocation2 + $0xa0] sm:$0xff] 0.0
    %36 = vst [vmem:[#allocation2 + $0xa8] sm:$0xff] 0.0
    %37 = vst [vmem:[#allocation2 + $0xb0] sm:$0xff] 0.0
    %38 = vst [vmem:[#allocation2 + $0xb8] sm:$0xff] 0.0
    %39 = vst [vmem:[#allocation2 + $0xc0] sm:$0xff] 0.0
    %40 = vst [vmem:[#allocation2 + $0xc8] sm:$0xff] 0.0
    %41 = vst [vmem:[#allocation2 + $0xd0] sm:$0xff] 0.0
    %42 = vst [vmem:[#allocation2 + $0xd8] sm:$0xff] 0.0
    %43 = vst [vmem:[#allocation2 + $0xe0] sm:$0xff] 0.0
    %44 = vst [vmem:[#allocation2 + $0xe8] sm:$0xff] 0.0
    %45 = vst [vmem:[#allocation2 + $0xf0] sm:$0xff] 0.0
    %46 = vst [vmem:[#allocation2 + $0xf8] sm:$0xff] 0.0
  $region13: #{gae_forward.6} parent=0 // pred_fallthru
    _
  %s47 = smul.u32 0, 256
  %s48 = scalar_lea.vmem %s1, %s47
  %v49 = vld [vmem:[%s48] sm:$0xff]
  %v50 = vld [vmem:[%s48 + $0x8] sm:$0xff]
  %v51 = vld [vmem:[%s48 + $0x10] sm:$0xff]
  %v52 = vld [vmem:[%s48 + $0x18] sm:$0xff]
  %v53 = vld [vmem:[%s48 + $0x20] sm:$0xff]
  %v54 = vld [vmem:[%s48 + $0x28] sm:$0xff]
  %v55 = vld [vmem:[%s48 + $0x30] sm:$0xff]
  %v56 = vld [vmem:[%s48 + $0x38] sm:$0xff]
  %v57 = vld [vmem:[%s48 + $0x40] sm:$0xff]
  %v58 = vld [vmem:[%s48 + $0x48] sm:$0xff]
  %v59 = vld [vmem:[%s48 + $0x50] sm:$0xff]
  %v60 = vld [vmem:[%s48 + $0x58] sm:$0xff]
  %v61 = vld [vmem:[%s48 + $0x60] sm:$0xff]
  %v62 = vld [vmem:[%s48 + $0x68] sm:$0xff]
  %v63 = vld [vmem:[%s48 + $0x70] sm:$0xff]
  %v64 = vld [vmem:[%s48 + $0x78] sm:$0xff]
  %v65 = vld [vmem:[%s48 + $0x80] sm:$0xff]
  %v66 = vld [vmem:[%s48 + $0x88] sm:$0xff]
  %v67 = vld [vmem:[%s48 + $0x90] sm:$0xff]
  %v68 = vld [vmem:[%s48 + $0x98] sm:$0xff]
  %v69 = vld [vmem:[%s48 + $0xa0] sm:$0xff]
  %v70 = vld [vmem:[%s48 + $0xa8] sm:$0xff]
  %v71 = vld [vmem:[%s48 + $0xb0] sm:$0xff]
  %v72 = vld [vmem:[%s48 + $0xb8] sm:$0xff]
  %v73 = vld [vmem:[%s48 + $0xc0] sm:$0xff]
  %v74 = vld [vmem:[%s48 + $0xc8] sm:$0xff]
  %v75 = vld [vmem:[%s48 + $0xd0] sm:$0xff]
  %v76 = vld [vmem:[%s48 + $0xd8] sm:$0xff]
  %v77 = vld [vmem:[%s48 + $0xe0] sm:$0xff]
  %v78 = vld [vmem:[%s48 + $0xe8] sm:$0xff]
  %v79 = vld [vmem:[%s48 + $0xf0] sm:$0xff]
  %v80 = vld [vmem:[%s48 + $0xf8] sm:$0xff]
  %v81 = vld [vmem:[#allocation2] sm:$0xff]
  %v82 = vld [vmem:[#allocation2 + $0x8] sm:$0xff]
  %v83 = vld [vmem:[#allocation2 + $0x10] sm:$0xff]
  %v84 = vld [vmem:[#allocation2 + $0x18] sm:$0xff]
  %v85 = vld [vmem:[#allocation2 + $0x20] sm:$0xff]
  %v86 = vld [vmem:[#allocation2 + $0x28] sm:$0xff]
  %v87 = vld [vmem:[#allocation2 + $0x30] sm:$0xff]
  %v88 = vld [vmem:[#allocation2 + $0x38] sm:$0xff]
  %v89 = vld [vmem:[#allocation2 + $0x40] sm:$0xff]
  %v90 = vld [vmem:[#allocation2 + $0x48] sm:$0xff]
  %v91 = vld [vmem:[#allocation2 + $0x50] sm:$0xff]
  %v92 = vld [vmem:[#allocation2 + $0x58] sm:$0xff]
  %v93 = vld [vmem:[#allocation2 + $0x60] sm:$0xff]
  %v94 = vld [vmem:[#allocation2 + $0x68] sm:$0xff]
  %v95 = vld [vmem:[#allocation2 + $0x70] sm:$0xff]
  %v96 = vld [vmem:[#allocation2 + $0x78] sm:$0xff]
  %v97 = vld [vmem:[#allocation2 + $0x80] sm:$0xff]
  %v98 = vld [vmem:[#allocation2 + $0x88] sm:$0xff]
  %v99 = vld [vmem:[#allocation2 + $0x90] sm:$0xff]
  %v100 = vld [vmem:[#allocation2 + $0x98] sm:$0xff]
  %v101 = vld [vmem:[#allocation2 + $0xa0] sm:$0xff]
  %v102 = vld [vmem:[#allocation2 + $0xa8] sm:$0xff]
  %v103 = vld [vmem:[#allocation2 + $0xb0] sm:$0xff]
  %v104 = vld [vmem:[#allocation2 + $0xb8] sm:$0xff]
  %v105 = vld [vmem:[#allocation2 + $0xc0] sm:$0xff]
  %v106 = vld [vmem:[#allocation2 + $0xc8] sm:$0xff]
  %v107 = vld [vmem:[#allocation2 + $0xd0] sm:$0xff]
  %v108 = vld [vmem:[#allocation2 + $0xd8] sm:$0xff]
  %v109 = vld [vmem:[#allocation2 + $0xe0] sm:$0xff]
  %v110 = vld [vmem:[#allocation2 + $0xe8] sm:$0xff]
  %v111 = vld [vmem:[#allocation2 + $0xf0] sm:$0xff]
  %v112 = vld [vmem:[#allocation2 + $0xf8] sm:$0xff]
  %v113 = vld [vmem:[%s0] sm:$0xff]
  %v114 = vld [vmem:[%s0 + $0x8] sm:$0xff]
  %v115 = vld [vmem:[%s0 + $0x10] sm:$0xff]
  %v116 = vld [vmem:[%s0 + $0x18] sm:$0xff]
  %v117 = vld [vmem:[%s0 + $0x20] sm:$0xff]
  %v118 = vld [vmem:[%s0 + $0x28] sm:$0xff]
  %v119 = vld [vmem:[%s0 + $0x30] sm:$0xff]
  %v120 = vld [vmem:[%s0 + $0x38] sm:$0xff]
  %v121 = vld [vmem:[%s0 + $0x40] sm:$0xff]
  %v122 = vld [vmem:[%s0 + $0x48] sm:$0xff]
  %v123 = vld [vmem:[%s0 + $0x50] sm:$0xff]
  %v124 = vld [vmem:[%s0 + $0x58] sm:$0xff]
  %v125 = vld [vmem:[%s0 + $0x60] sm:$0xff]
  %v126 = vld [vmem:[%s0 + $0x68] sm:$0xff]
  %v127 = vld [vmem:[%s0 + $0x70] sm:$0xff]
  %v128 = vld [vmem:[%s0 + $0x78] sm:$0xff]
  %v129 = vld [vmem:[%s0 + $0x80] sm:$0xff]
  %v130 = vld [vmem:[%s0 + $0x88] sm:$0xff]
  %v131 = vld [vmem:[%s0 + $0x90] sm:$0xff]
  %v132 = vld [vmem:[%s0 + $0x98] sm:$0xff]
  %v133 = vld [vmem:[%s0 + $0xa0] sm:$0xff]
  %v134 = vld [vmem:[%s0 + $0xa8] sm:$0xff]
  %v135 = vld [vmem:[%s0 + $0xb0] sm:$0xff]
  %v136 = vld [vmem:[%s0 + $0xb8] sm:$0xff]
  %v137 = vld [vmem:[%s0 + $0xc0] sm:$0xff]
  %v138 = vld [vmem:[%s0 + $0xc8] sm:$0xff]
  %v139 = vld [vmem:[%s0 + $0xd0] sm:$0xff]
  %v140 = vld [vmem:[%s0 + $0xd8] sm:$0xff]
  %v141 = vld [vmem:[%s0 + $0xe0] sm:$0xff]
  %v142 = vld [vmem:[%s0 + $0xe8] sm:$0xff]
  %v143 = vld [vmem:[%s0 + $0xf0] sm:$0xff]
  %v144 = vld [vmem:[%s0 + $0xf8] sm:$0xff]
  %v145 = vld [vmem:[%s0 + $0x100] sm:$0xff]
  %v146 = vld [vmem:[%s0 + $0x108] sm:$0xff]
  %v147 = vld [vmem:[%s0 + $0x110] sm:$0xff]
  %v148 = vld [vmem:[%s0 + $0x118] sm:$0xff]
  %v149 = vld [vmem:[%s0 + $0x120] sm:$0xff]
  %v150 = vld [vmem:[%s0 + $0x128] sm:$0xff]
  %v151 = vld [vmem:[%s0 + $0x130] sm:$0xff]
  %v152 = vld [vmem:[%s0 + $0x138] sm:$0xff]
  %v153 = vld [vmem:[%s0 + $0x140] sm:$0xff]
  %v154 = vld [vmem:[%s0 + $0x148] sm:$0xff]
  %v155 = vld [vmem:[%s0 + $0x150] sm:$0xff]
  %v156 = vld [vmem:[%s0 + $0x158] sm:$0xff]
  %v157 = vld [vmem:[%s0 + $0x160] sm:$0xff]
  %v158 = vld [vmem:[%s0 + $0x168] sm:$0xff]
  %v159 = vld [vmem:[%s0 + $0x170] sm:$0xff]
  %v160 = vld [vmem:[%s0 + $0x178] sm:$0xff]
  %v161 = vld [vmem:[%s0 + $0x180] sm:$0xff]
  %v162 = vld [vmem:[%s0 + $0x188] sm:$0xff]
  %v163 = vld [vmem:[%s0 + $0x190] sm:$0xff]
  %v164 = vld [vmem:[%s0 + $0x198] sm:$0xff]
  %v165 = vld [vmem:[%s0 + $0x1a0] sm:$0xff]
  %v166 = vld [vmem:[%s0 + $0x1a8] sm:$0xff]
  %v167 = vld [vmem:[%s0 + $0x1b0] sm:$0xff]
  %v168 = vld [vmem:[%s0 + $0x1b8] sm:$0xff]
  %v169 = vld [vmem:[%s0 + $0x1c0] sm:$0xff]
  %v170 = vld [vmem:[%s0 + $0x1c8] sm:$0xff]
  %v171 = vld [vmem:[%s0 + $0x1d0] sm:$0xff]
  %v172 = vld [vmem:[%s0 + $0x1d8] sm:$0xff]
  %v173 = vld [vmem:[%s0 + $0x1e0] sm:$0xff]
  %v174 = vld [vmem:[%s0 + $0x1e8] sm:$0xff]
  %v175 = vld [vmem:[%s0 + $0x1f0] sm:$0xff]
  %v176 = vld [vmem:[%s0 + $0x1f8] sm:$0xff]
  %177 = vmatprep.subr.mxu0 0.0
  %178 = vmatpush1.msra.mxu0 %v49
  %179 = vmatprep.subr.mxu0 0.0
  %180 = vmatpush1.msra.mxu0 %v50
  %181 = vmatprep.subr.mxu0 0.0
  %182 = vmatpush1.msra.mxu0 %v51
  %183 = vmatprep.subr.mxu0 0.0
  %184 = vmatpush1.msra.mxu0 %v52
  %185 = vmatprep.subr.mxu0 0.0
  %186 = vmatpush1.msra.mxu0 %v53
  %187 = vmatprep.subr.mxu0 0.0
  %188 = vmatpush1.msra.mxu0 %v54
  %189 = vmatprep.subr.mxu0 0.0
  %190 = vmatpush1.msra.mxu0 %v55
  %191 = vmatprep.subr.mxu0 0.0
  %192 = vmatpush1.msra.mxu0 %v56
  %193 = vmatprep.subr.mxu0 0.0
  %194 = vmatpush1.msra.mxu0 %v57
  %195 = vmatprep.subr.mxu0 0.0
  %196 = vmatpush1.msra.mxu0 %v58
  %197 = vmatprep.subr.mxu0 0.0
  %198 = vmatpush1.msra.mxu0 %v59
  %199 = vmatprep.subr.mxu0 0.0
  %200 = vmatpush1.msra.mxu0 %v60
  %201 = vmatprep.subr.mxu0 0.0
  %202 = vmatpush1.msra.mxu0 %v61
  %203 = vmatprep.subr.mxu0 0.0
  %204 = vmatpush1.msra.mxu0 %v62
  %205 = vmatprep.subr.mxu0 0.0
  %206 = vmatpush1.msra.mxu0 %v63
  %207 = vmatprep.subr.mxu0 0.0
  %208 = vmatpush1.msra.mxu0 %v64
  %209 = vmatprep.subr.mxu0 0.0
  %210 = vmatpush1.msra.mxu0 %v65
  %211 = vmatprep.subr.mxu0 0.0
  %212 = vmatpush1.msra.mxu0 %v66
  %213 = vmatprep.subr.mxu0 0.0
  %214 = vmatpush1.msra.mxu0 %v67
  %215 = vmatprep.subr.mxu0 0.0
  %216 = vmatpush1.msra.mxu0 %v68
  %217 = vmatprep.subr.mxu0 0.0
  %218 = vmatpush1.msra.mxu0 %v69
  %219 = vmatprep.subr.mxu0 0.0
  %220 = vmatpush1.msra.mxu0 %v70
  %221 = vmatprep.subr.mxu0 0.0
  %222 = vmatpush1.msra.mxu0 %v71
  %223 = vmatprep.subr.mxu0 0.0
  %224 = vmatpush1.msra.mxu0 %v72
  %225 = vmatprep.subr.mxu0 0.0
  %226 = vmatpush1.msra.mxu0 %v73
  %227 = vmatprep.subr.mxu0 0.0
  %228 = vmatpush1.msra.mxu0 %v74
  %229 = vmatprep.subr.mxu0 0.0
  %230 = vmatpush1.msra.mxu0 %v75
  %231 = vmatprep.subr.mxu0 0.0
  %232 = vmatpush1.msra.mxu0 %v76
  %233 = vmatprep.subr.mxu0 0.0
  %234 = vmatpush1.msra.mxu0 %v77
  %235 = vmatprep.subr.mxu0 0.0
  %236 = vmatpush1.msra.mxu0 %v78
  %237 = vmatprep.subr.mxu0 0.0
  %238 = vmatpush1.msra.mxu0 %v79
  %239 = vmatprep.subr.mxu0 0.0
  %240 = vmatpush1.msra.mxu0 %v80
  %241 = vmatprep.mubr.f32.mxu0 %v114
  %242 = vmatmul.mubr.f32.gmra.mrb[0].mxu0 %v113
  %v243 = vpop.f32.mrb[0].mxu0
  %v244 = vadd.f32 0.0, %v243
  %v245 = vpop.f32.mrb[0].mxu0
  %246 = vmatprep.mubr.f32.mxu0 %v116
  %247 = vmatmul.mubr.f32.gmra.mrb[0].mxu0 %v115
  %v248 = vpop.f32.mrb[0].mxu0
  %v249 = vadd.f32 0.0, %v248
  %v250 = vpop.f32.mrb[0].mxu0
  %251 = vmatprep.mubr.f32.mxu0 %v118
  %252 = vmatmul.mubr.f32.gmra.mrb[0].mxu0 %v117
  %v253 = vpop.f32.mrb[0].mxu0
  %v254 = vadd.f32 0.0, %v253
  %v255 = vpop.f32.mrb[0].mxu0
  %256 = vmatprep.mubr.f32.mxu0 %v120
  %257 = vmatmul.mubr.f32.gmra.mrb[0].mxu0 %v119
  %v258 = vpop.f32.mrb[0].mxu0
  %v259 = vadd.f32 0.0, %v258
  %v260 = vpop.f32.mrb[0].mxu0
  %261 = vmatprep.mubr.f32.mxu0 %v122
  %262 = vmatmul.mubr.f32.gmra.mrb[0].mxu0 %v121
  %v263 = vpop.f32.mrb[0].mxu0
  %v264 = vadd.f32 0.0, %v263
  %v265 = vpop.f32.mrb[0].mxu0
  %266 = vmatprep.mubr.f32.mxu0 %v124
  %267 = vmatmul.mubr.f32.gmra.mrb[0].mxu0 %v123
  %v268 = vpop.f32.mrb[0].mxu0
  %v269 = vadd.f32 0.0, %v268
  %v270 = vpop.f32.mrb[0].mxu0
  %271 = vmatprep.mubr.f32.mxu0 %v126
  %272 = vmatmul.mubr.f32.gmra.mrb[0].mxu0 %v125
  %v273 = vpop.f32.mrb[0].mxu0
  %v274 = vadd.f32 0.0, %v273
  %v275 = vpop.f32.mrb[0].mxu0
  %276 = vmatprep.mubr.f32.mxu0 %v128
  %277 = vmatmul.mubr.f32.gmra.mrb[0].mxu0 %v127
  %v278 = vpop.f32.mrb[0].mxu0
  %v279 = vadd.f32 0.0, %v278
  %v280 = vpop.f32.mrb[0].mxu0
  %281 = vmatprep.mubr.f32.mxu0 %v130
  %282 = vmatmul.mubr.f32.gmra.mrb[0].mxu0 %v129
  %v283 = vpop.f32.mrb[0].mxu0
  %v284 = vadd.f32 0.0, %v283
  %v285 = vpop.f32.mrb[0].mxu0
  %286 = vmatprep.mubr.f32.mxu0 %v132
  %287 = vmatmul.mubr.f32.gmra.mrb[0].mxu0 %v131
  %v288 = vpop.f32.mrb[0].mxu0
  %v289 = vadd.f32 0.0, %v288
  %v290 = vpop.f32.mrb[0].mxu0
  %291 = vmatprep.mubr.f32.mxu0 %v134
  %292 = vmatmul.mubr.f32.gmra.mrb[0].mxu0 %v133
  %v293 = vpop.f32.mrb[0].mxu0
  %v294 = vadd.f32 0.0, %v293
  %v295 = vpop.f32.mrb[0].mxu0
  %296 = vmatprep.mubr.f32.mxu0 %v136
  %297 = vmatmul.mubr.f32.gmra.mrb[0].mxu0 %v135
  %v298 = vpop.f32.mrb[0].mxu0
  %v299 = vadd.f32 0.0, %v298
  %v300 = vpop.f32.mrb[0].mxu0
  %301 = vmatprep.mubr.f32.mxu0 %v138
  %302 = vmatmul.mubr.f32.gmra.mrb[0].mxu0 %v137
  %v303 = vpop.f32.mrb[0].mxu0
  %v304 = vadd.f32 0.0, %v303
  %v305 = vpop.f32.mrb[0].mxu0
  %306 = vmatprep.mubr.f32.mxu0 %v140
  %307 = vmatmul.mubr.f32.gmra.mrb[0].mxu0 %v139
  %v308 = vpop.f32.mrb[0].mxu0
  %v309 = vadd.f32 0.0, %v308
  %v310 = vpop.f32.mrb[0].mxu0
  %311 = vmatprep.mubr.f32.mxu0 %v142
  %312 = vmatmul.mubr.f32.gmra.mrb[0].mxu0 %v141
  %v313 = vpop.f32.mrb[0].mxu0
  %v314 = vadd.f32 0.0, %v313
  %v315 = vpop.f32.mrb[0].mxu0
  %316 = vmatprep.mubr.f32.mxu0 %v144
  %317 = vmatmul.mubr.f32.gmra.mrb[0].mxu0 %v143
  %v318 = vpop.f32.mrb[0].mxu0
  %v319 = vadd.f32 0.0, %v318
  %v320 = vpop.f32.mrb[0].mxu0
  %321 = vmatprep.mubr.f32.mxu0 %v146
  %322 = vmatmul.mubr.f32.gmra.mrb[0].mxu0 %v145
  %v323 = vpop.f32.mrb[0].mxu0
  %v324 = vadd.f32 0.0, %v323
  %v325 = vpop.f32.mrb[0].mxu0
  %326 = vmatprep.mubr.f32.mxu0 %v148
  %327 = vmatmul.mubr.f32.gmra.mrb[0].mxu0 %v147
  %v328 = vpop.f32.mrb[0].mxu0
  %v329 = vadd.f32 0.0, %v328
  %v330 = vpop.f32.mrb[0].mxu0
  %331 = vmatprep.mubr.f32.mxu0 %v150
  %332 = vmatmul.mubr.f32.gmra.mrb[0].mxu0 %v149
  %v333 = vpop.f32.mrb[0].mxu0
  %v334 = vadd.f32 0.0, %v333
  %v335 = vpop.f32.mrb[0].mxu0
  %336 = vmatprep.mubr.f32.mxu0 %v152
  %337 = vmatmul.mubr.f32.gmra.mrb[0].mxu0 %v151
  %v338 = vpop.f32.mrb[0].mxu0
  %v339 = vadd.f32 0.0, %v338
  %v340 = vpop.f32.mrb[0].mxu0
  %341 = vmatprep.mubr.f32.mxu0 %v154
  %342 = vmatmul.mubr.f32.gmra.mrb[0].mxu0 %v153
  %v343 = vpop.f32.mrb[0].mxu0
  %v344 = vadd.f32 0.0, %v343
  %v345 = vpop.f32.mrb[0].mxu0
  %346 = vmatprep.mubr.f32.mxu0 %v156
  %347 = vmatmul.mubr.f32.gmra.mrb[0].mxu0 %v155
  %v348 = vpop.f32.mrb[0].mxu0
  %v349 = vadd.f32 0.0, %v348
  %v350 = vpop.f32.mrb[0].mxu0
  %351 = vmatprep.mubr.f32.mxu0 %v158
  %352 = vmatmul.mubr.f32.gmra.mrb[0].mxu0 %v157
  %v353 = vpop.f32.mrb[0].mxu0
  %v354 = vadd.f32 0.0, %v353
  %v355 = vpop.f32.mrb[0].mxu0
  %356 = vmatprep.mubr.f32.mxu0 %v160
  %357 = vmatmul.mubr.f32.gmra.mrb[0].mxu0 %v159
  %v358 = vpop.f32.mrb[0].mxu0
  %v359 = vadd.f32 0.0, %v358
  %v360 = vpop.f32.mrb[0].mxu0
  %361 = vmatprep.mubr.f32.mxu0 %v162
  %362 = vmatmul.mubr.f32.gmra.mrb[0].mxu0 %v161
  %v363 = vpop.f32.mrb[0].mxu0
  %v364 = vadd.f32 0.0, %v363
  %v365 = vpop.f32.mrb[0].mxu0
  %366 = vmatprep.mubr.f32.mxu0 %v164
  %367 = vmatmul.mubr.f32.gmra.mrb[0].mxu0 %v163
  %v368 = vpop.f32.mrb[0].mxu0
  %v369 = vadd.f32 0.0, %v368
  %v370 = vpop.f32.mrb[0].mxu0
  %371 = vmatprep.mubr.f32.mxu0 %v166
  %372 = vmatmul.mubr.f32.gmra.mrb[0].mxu0 %v165
  %v373 = vpop.f32.mrb[0].mxu0
  %v374 = vadd.f32 0.0, %v373
  %v375 = vpop.f32.mrb[0].mxu0
  %376 = vmatprep.mubr.f32.mxu0 %v168
  %377 = vmatmul.mubr.f32.gmra.mrb[0].mxu0 %v167
  %v378 = vpop.f32.mrb[0].mxu0
  %v379 = vadd.f32 0.0, %v378
  %v380 = vpop.f32.mrb[0].mxu0
  %381 = vmatprep.mubr.f32.mxu0 %v170
  %382 = vmatmul.mubr.f32.gmra.mrb[0].mxu0 %v169
  %v383 = vpop.f32.mrb[0].mxu0
  %v384 = vadd.f32 0.0, %v383
  %v385 = vpop.f32.mrb[0].mxu0
  %386 = vmatprep.mubr.f32.mxu0 %v172
  %387 = vmatmul.mubr.f32.gmra.mrb[0].mxu0 %v171
  %v388 = vpop.f32.mrb[0].mxu0
  %v389 = vadd.f32 0.0, %v388
  %v390 = vpop.f32.mrb[0].mxu0
  %391 = vmatprep.mubr.f32.mxu0 %v174
  %392 = vmatmul.mubr.f32.gmra.mrb[0].mxu0 %v173
  %v393 = vpop.f32.mrb[0].mxu0
  %v394 = vadd.f32 0.0, %v393
  %v395 = vpop.f32.mrb[0].mxu0
  %396 = vmatprep.mubr.f32.mxu0 %v176
  %397 = vmatmul.mubr.f32.gmra.mrb[0].mxu0 %v175
  %v398 = vpop.f32.mrb[0].mxu0
  %v399 = vadd.f32 0.0, %v398
  %v400 = vpop.f32.mrb[0].mxu0
  %401 = vdwg.mxu0
  %v402 = vadd.f32 %v81, %v244
  %v403 = vadd.f32 %v82, %v249
  %v404 = vadd.f32 %v83, %v254
  %v405 = vadd.f32 %v84, %v259
  %v406 = vadd.f32 %v85, %v264
  %v407 = vadd.f32 %v86, %v269
  %v408 = vadd.f32 %v87, %v274
  %v409 = vadd.f32 %v88, %v279
  %v410 = vadd.f32 %v89, %v284
  %v411 = vadd.f32 %v90, %v289
  %v412 = vadd.f32 %v91, %v294
  %v413 = vadd.f32 %v92, %v299
  %v414 = vadd.f32 %v93, %v304
  %v415 = vadd.f32 %v94, %v309
  %v416 = vadd.f32 %v95, %v314
  %v417 = vadd.f32 %v96, %v319
  %v418 = vadd.f32 %v97, %v324
  %v419 = vadd.f32 %v98, %v329
  %v420 = vadd.f32 %v99, %v334
  %v421 = vadd.f32 %v100, %v339
  %v422 = vadd.f32 %v101, %v344
  %v423 = vadd.f32 %v102, %v349
  %v424 = vadd.f32 %v103, %v354
  %v425 = vadd.f32 %v104, %v359
  %v426 = vadd.f32 %v105, %v364
  %v427 = vadd.f32 %v106, %v369
  %v428 = vadd.f32 %v107, %v374
  %v429 = vadd.f32 %v108, %v379
  %v430 = vadd.f32 %v109, %v384
  %v431 = vadd.f32 %v110, %v389
  %v432 = vadd.f32 %v111, %v394
  %v433 = vadd.f32 %v112, %v399
  %434 = vst [vmem:[#allocation2] sm:$0xff] %v402
  %435 = vst [vmem:[#allocation2 + $0x8] sm:$0xff] %v403
  %436 = vst [vmem:[#allocation2 + $0x10] sm:$0xff] %v404
  %437 = vst [vmem:[#allocation2 + $0x18] sm:$0xff] %v405
  %438 = vst [vmem:[#allocation2 + $0x20] sm:$0xff] %v406
  %439 = vst [vmem:[#allocation2 + $0x28] sm:$0xff] %v407
  %440 = vst [vmem:[#allocation2 + $0x30] sm:$0xff] %v408
  %441 = vst [vmem:[#allocation2 + $0x38] sm:$0xff] %v409
  %442 = vst [vmem:[#allocation2 + $0x40] sm:$0xff] %v410
  %443 = vst [vmem:[#allocation2 + $0x48] sm:$0xff] %v411
  %444 = vst [vmem:[#allocation2 + $0x50] sm:$0xff] %v412
  %445 = vst [vmem:[#allocation2 + $0x58] sm:$0xff] %v413
  %446 = vst [vmem:[#allocation2 + $0x60] sm:$0xff] %v414
  %447 = vst [vmem:[#allocation2 + $0x68] sm:$0xff] %v415
  %448 = vst [vmem:[#allocation2 + $0x70] sm:$0xff] %v416
  %449 = vst [vmem:[#allocation2 + $0x78] sm:$0xff] %v417
  %450 = vst [vmem:[#allocation2 + $0x80] sm:$0xff] %v418
  %451 = vst [vmem:[#allocation2 + $0x88] sm:$0xff] %v419
  %452 = vst [vmem:[#allocation2 + $0x90] sm:$0xff] %v420
  %453 = vst [vmem:[#allocation2 + $0x98] sm:$0xff] %v421
  %454 = vst [vmem:[#allocation2 + $0xa0] sm:$0xff] %v422
  %455 = vst [vmem:[#allocation2 + $0xa8] sm:$0xff] %v423
  %456 = vst [vmem:[#allocation2 + $0xb0] sm:$0xff] %v424
  %457 = vst [vmem:[#allocation2 + $0xb8] sm:$0xff] %v425
  %458 = vst [vmem:[#allocation2 + $0xc0] sm:$0xff] %v426
  %459 = vst [vmem:[#allocation2 + $0xc8] sm:$0xff] %v427
  %460 = vst [vmem:[#allocation2 + $0xd0] sm:$0xff] %v428
  %461 = vst [vmem:[#allocation2 + $0xd8] sm:$0xff] %v429
  %462 = vst [vmem:[#allocation2 + $0xe0] sm:$0xff] %v430
  %463 = vst [vmem:[#allocation2 + $0xe8] sm:$0xff] %v431
  %464 = vst [vmem:[#allocation2 + $0xf0] sm:$0xff] %v432
  %465 = vst [vmem:[#allocation2 + $0xf8] sm:$0xff] %v433
  // Predicated region
  $region14: #{gae_forward.6} parent=0 // pred_check
    %p466 = pneg %p11
  $region15: #{gae_forward.6} parent=0 // pred_check_branch
    %468 = sbr.rel (%p466) target = $region17
  $region16: #{gae_forward.6} parent=0 // pred_region
    %v469 = vld [vmem:[#allocation2] sm:$0xff]
    %v470 = vld [vmem:[#allocation2 + $0x8] sm:$0xff]
    %v471 = vld [vmem:[#allocation2 + $0x10] sm:$0xff]
    %v472 = vld [vmem:[#allocation2 + $0x18] sm:$0xff]
    %v473 = vld [vmem:[#allocation2 + $0x20] sm:$0xff]
    %v474 = vld [vmem:[#allocation2 + $0x28] sm:$0xff]
    %v475 = vld [vmem:[#allocation2 + $0x30] sm:$0xff]
    %v476 = vld [vmem:[#allocation2 + $0x38] sm:$0xff]
    %v477 = vld [vmem:[#allocation2 + $0x40] sm:$0xff]
    %v478 = vld [vmem:[#allocation2 + $0x48] sm:$0xff]
    %v479 = vld [vmem:[#allocation2 + $0x50] sm:$0xff]
    %v480 = vld [vmem:[#allocation2 + $0x58] sm:$0xff]
    %v481 = vld [vmem:[#allocation2 + $0x60] sm:$0xff]
    %v482 = vld [vmem:[#allocation2 + $0x68] sm:$0xff]
    %v483 = vld [vmem:[#allocation2 + $0x70] sm:$0xff]
    %v484 = vld [vmem:[#allocation2 + $0x78] sm:$0xff]
    %v485 = vld [vmem:[#allocation2 + $0x80] sm:$0xff]
    %v486 = vld [vmem:[#allocation2 + $0x88] sm:$0xff]
    %v487 = vld [vmem:[#allocation2 + $0x90] sm:$0xff]
    %v488 = vld [vmem:[#allocation2 + $0x98] sm:$0xff]
    %v489 = vld [vmem:[#allocation2 + $0xa0] sm:$0xff]
    %v490 = vld [vmem:[#allocation2 + $0xa8] sm:$0xff]
    %v491 = vld [vmem:[#allocation2 + $0xb0] sm:$0xff]
    %v492 = vld [vmem:[#allocation2 + $0xb8] sm:$0xff]
    %v493 = vld [vmem:[#allocation2 + $0xc0] sm:$0xff]
    %v494 = vld [vmem:[#allocation2 + $0xc8] sm:$0xff]
    %v495 = vld [vmem:[#allocation2 + $0xd0] sm:$0xff]
    %v496 = vld [vmem:[#allocation2 + $0xd8] sm:$0xff]
    %v497 = vld [vmem:[#allocation2 + $0xe0] sm:$0xff]
    %v498 = vld [vmem:[#allocation2 + $0xe8] sm:$0xff]
    %v499 = vld [vmem:[#allocation2 + $0xf0] sm:$0xff]
    %v500 = vld [vmem:[#allocation2 + $0xf8] sm:$0xff]
    %v501 = vmax.f32 %v469, 0.0
    %v502 = vmax.f32 %v470, 0.0
    %v503 = vmax.f32 %v471, 0.0
    %v504 = vmax.f32 %v472, 0.0
    %v505 = vmax.f32 %v473, 0.0
    %v506 = vmax.f32 %v474, 0.0
    %v507 = vmax.f32 %v475, 0.0
    %v508 = vmax.f32 %v476, 0.0
    %v509 = vmax.f32 %v477, 0.0
    %v510 = vmax.f32 %v478, 0.0
    %v511 = vmax.f32 %v479, 0.0
    %v512 = vmax.f32 %v480, 0.0
    %v513 = vmax.f32 %v481, 0.0
    %v514 = vmax.f32 %v482, 0.0
    %v515 = vmax.f32 %v483, 0.0
    %v516 = vmax.f32 %v484, 0.0
    %v517 = vmax.f32 %v485, 0.0
    %v518 = vmax.f32 %v486, 0.0
    %v519 = vmax.f32 %v487, 0.0
    %v520 = vmax.f32 %v488, 0.0
    %v521 = vmax.f32 %v489, 0.0
    %v522 = vmax.f32 %v490, 0.0
    %v523 = vmax.f32 %v491, 0.0
    %v524 = vmax.f32 %v492, 0.0
    %v525 = vmax.f32 %v493, 0.0
    %v526 = vmax.f32 %v494, 0.0
    %v527 = vmax.f32 %v495, 0.0
    %v528 = vmax.f32 %v496, 0.0
    %v529 = vmax.f32 %v497, 0.0
    %v530 = vmax.f32 %v498, 0.0
    %v531 = vmax.f32 %v499, 0.0
    %v532 = vmax.f32 %v500, 0.0
    %533 = vst [vmem:[%s2] sm:$0xff] %v501
    %534 = vst [vmem:[%s2 + $0x8] sm:$0xff] %v502
    %535 = vst [vmem:[%s2 + $0x10] sm:$0xff] %v503
    %536 = vst [vmem:[%s2 + $0x18] sm:$0xff] %v504
    %537 = vst [vmem:[%s2 + $0x20] sm:$0xff] %v505
    %538 = vst [vmem:[%s2 + $0x28] sm:$0xff] %v506
    %539 = vst [vmem:[%s2 + $0x30] sm:$0xff] %v507
    %540 = vst [vmem:[%s2 + $0x38] sm:$0xff] %v508
    %541 = vst [vmem:[%s2 + $0x40] sm:$0xff] %v509
    %542 = vst [vmem:[%s2 + $0x48] sm:$0xff] %v510
    %543 = vst [vmem:[%s2 + $0x50] sm:$0xff] %v511
    %544 = vst [vmem:[%s2 + $0x58] sm:$0xff] %v512
    %545 = vst [vmem:[%s2 + $0x60] sm:$0xff] %v513
    %546 = vst [vmem:[%s2 + $0x68] sm:$0xff] %v514
    %547 = vst [vmem:[%s2 + $0x70] sm:$0xff] %v515
    %548 = vst [vmem:[%s2 + $0x78] sm:$0xff] %v516
    %549 = vst [vmem:[%s2 + $0x80] sm:$0xff] %v517
    %550 = vst [vmem:[%s2 + $0x88] sm:$0xff] %v518
    %551 = vst [vmem:[%s2 + $0x90] sm:$0xff] %v519
    %552 = vst [vmem:[%s2 + $0x98] sm:$0xff] %v520
    %553 = vst [vmem:[%s2 + $0xa0] sm:$0xff] %v521
    %554 = vst [vmem:[%s2 + $0xa8] sm:$0xff] %v522
    %555 = vst [vmem:[%s2 + $0xb0] sm:$0xff] %v523
    %556 = vst [vmem:[%s2 + $0xb8] sm:$0xff] %v524
    %557 = vst [vmem:[%s2 + $0xc0] sm:$0xff] %v525
    %558 = vst [vmem:[%s2 + $0xc8] sm:$0xff] %v526
    %559 = vst [vmem:[%s2 + $0xd0] sm:$0xff] %v527
    %560 = vst [vmem:[%s2 + $0xd8] sm:$0xff] %v528
    %561 = vst [vmem:[%s2 + $0xe0] sm:$0xff] %v529
    %562 = vst [vmem:[%s2 + $0xe8] sm:$0xff] %v530
    %563 = vst [vmem:[%s2 + $0xf0] sm:$0xff] %v531
    %564 = vst [vmem:[%s2 + $0xf8] sm:$0xff] %v532
  $region17: #{gae_forward.6} parent=0 // pred_fallthru
    _
  // Predicated region
  $region18: #{gae_forward.6} parent=0 // pred_check
    _
  $region19: #{gae_forward.6} parent=0 // pred_check_branch
    %566 = sbr.rel (0) target = $region21
  $region20: #{gae_forward.6} parent=0 // pred_region
    _
  $region21: #{gae_forward.6} parent=0 // pred_fallthru
    _
  // Predicated region
  $region22: #{gae_forward.6} parent=0 // pred_check
    _
  $region23: #{gae_forward.6} parent=0 // pred_check_branch
    %568 = sbr.rel (0) target = $region25
  $region24: #{gae_forward.6} parent=0 // pred_region
    _
  $region25: #{gae_forward.6} parent=0 // pred_fallthru
    _

// kernel: gae_forward.8
$region0: #{gae_forward.8}
  #allocation0 [shape = 'u32[]', space=smem, size = 0x4, offset = 0x4, fixed_abs, tag = 'smem constant byte address 0x4 - core index']
  #allocation1 [shape = 'u32[144,128]{1,0:T(1,128)}', space=vmem, size = 0x12000, scoped, tag = 'internal scratch']
  #allocation2 [shape = 'f32[256,128]{1,0:T(8,128)}', space=vmem, size = 0x20000, scoped, tag = 'scratch operand']
  %s0 = inlined_call_operand.vmem [shape: f32[256,256], index: 0, kind: input, shape index: {}]
  %s1 = inlined_call_operand.vmem [shape: f32[256,128], index: 1, kind: input, shape index: {}]
  %s2 = inlined_call_operand.vmem [shape: f32[256,128], index: 2, kind: output, shape index: {}]
  %s3 = sld [smem:[#allocation0]]
  $region26: #{gae_forward.8} parent=0
    _
  %s5 = ssub.s32 1, %s3
  %s6 = scalar_select 0, %s5, %s3
  // Predicated region
  $region2: #{gae_forward.8} parent=0 // pred_check
    _
  $region3: #{gae_forward.8} parent=0 // pred_check_branch
    %8 = sbr.rel (0) target = $region5
  $region4: #{gae_forward.8} parent=0 // pred_region
    _
  $region5: #{gae_forward.8} parent=0 // pred_fallthru
    _
  // Predicated region
  $region6: #{gae_forward.8} parent=0 // pred_check
    _
  $region7: #{gae_forward.8} parent=0 // pred_check_branch
    %10 = sbr.rel (0) target = $region9
  $region8: #{gae_forward.8} parent=0 // pred_region
    _
  $region9: #{gae_forward.8} parent=0 // pred_fallthru
    _
  %p11 = scmp.eq.s32.totalorder 0, 0
  // Predicated region
  $region10: #{gae_forward.8} parent=0 // pred_check
    %p12 = pneg %p11
  $region11: #{gae_forward.8} parent=0 // pred_check_branch
    %14 = sbr.rel (%p12) target = $region13
  $region12: #{gae_forward.8} parent=0 // pred_region
    %15 = vst [vmem:[#allocation2] sm:$0xff] 0.0
    %16 = vst [vmem:[#allocation2 + $0x8] sm:$0xff] 0.0
    %17 = vst [vmem:[#allocation2 + $0x10] sm:$0xff] 0.0
    %18 = vst [vmem:[#allocation2 + $0x18] sm:$0xff] 0.0
    %19 = vst [vmem:[#allocation2 + $0x20] sm:$0xff] 0.0
    %20 = vst [vmem:[#allocation2 + $0x28] sm:$0xff] 0.0
    %21 = vst [vmem:[#allocation2 + $0x30] sm:$0xff] 0.0
    %22 = vst [vmem:[#allocation2 + $0x38] sm:$0xff] 0.0
    %23 = vst [vmem:[#allocation2 + $0x40] sm:$0xff] 0.0
    %24 = vst [vmem:[#allocation2 + $0x48] sm:$0xff] 0.0
    %25 = vst [vmem:[#allocation2 + $0x50] sm:$0xff] 0.0
    %26 = vst [vmem:[#allocation2 + $0x58] sm:$0xff] 0.0
    %27 = vst [vmem:[#allocation2 + $0x60] sm:$0xff] 0.0
    %28 = vst [vmem:[#allocation2 + $0x68] sm:$0xff] 0.0
    %29 = vst [vmem:[#allocation2 + $0x70] sm:$0xff] 0.0
    %30 = vst [vmem:[#allocation2 + $0x78] sm:$0xff] 0.0
    %31 = vst [vmem:[#allocation2 + $0x80] sm:$0xff] 0.0
    %32 = vst [vmem:[#allocation2 + $0x88] sm:$0xff] 0.0
    %33 = vst [vmem:[#allocation2 + $0x90] sm:$0xff] 0.0
    %34 = vst [vmem:[#allocation2 + $0x98] sm:$0xff] 0.0
    %35 = vst [vmem:[#allocation2 + $0xa0] sm:$0xff] 0.0
    %36 = vst [vmem:[#allocation2 + $0xa8] sm:$0xff] 0.0
    %37 = vst [vmem:[#allocation2 + $0xb0] sm:$0xff] 0.0
    %38 = vst [vmem:[#allocation2 + $0xb8] sm:$0xff] 0.0
    %39 = vst [vmem:[#allocation2 + $0xc0] sm:$0xff] 0.0
    %40 = vst [vmem:[#allocation2 + $0xc8] sm:$0xff] 0.0
    %41 = vst [vmem:[#allocation2 + $0xd0] sm:$0xff] 0.0
    %42 = vst [vmem:[#allocation2 + $0xd8] sm:$0xff] 0.0
    %43 = vst [vmem:[#allocation2 + $0xe0] sm:$0xff] 0.0
    %44 = vst [vmem:[#allocation2 + $0xe8] sm:$0xff] 0.0
    %45 = vst [vmem:[#allocation2 + $0xf0] sm:$0xff] 0.0
    %46 = vst [vmem:[#allocation2 + $0xf8] sm:$0xff] 0.0
  $region13: #{gae_forward.8} parent=0 // pred_fallthru
    _
  %s47 = smul.u32 0, 256
  %s48 = scalar_lea.vmem %s1, %s47
  %v49 = vld [vmem:[%s48] sm:$0xff]
  %v50 = vld [vmem:[%s48 + $0x8] sm:$0xff]
  %v51 = vld [vmem:[%s48 + $0x10] sm:$0xff]
  %v52 = vld [vmem:[%s48 + $0x18] sm:$0xff]
  %v53 = vld [vmem:[%s48 + $0x20] sm:$0xff]
  %v54 = vld [vmem:[%s48 + $0x28] sm:$0xff]
  %v55 = vld [vmem:[%s48 + $0x30] sm:$0xff]
  %v56 = vld [vmem:[%s48 + $0x38] sm:$0xff]
  %v57 = vld [vmem:[%s48 + $0x40] sm:$0xff]
  %v58 = vld [vmem:[%s48 + $0x48] sm:$0xff]
  %v59 = vld [vmem:[%s48 + $0x50] sm:$0xff]
  %v60 = vld [vmem:[%s48 + $0x58] sm:$0xff]
  %v61 = vld [vmem:[%s48 + $0x60] sm:$0xff]
  %v62 = vld [vmem:[%s48 + $0x68] sm:$0xff]
  %v63 = vld [vmem:[%s48 + $0x70] sm:$0xff]
  %v64 = vld [vmem:[%s48 + $0x78] sm:$0xff]
  %v65 = vld [vmem:[%s48 + $0x80] sm:$0xff]
  %v66 = vld [vmem:[%s48 + $0x88] sm:$0xff]
  %v67 = vld [vmem:[%s48 + $0x90] sm:$0xff]
  %v68 = vld [vmem:[%s48 + $0x98] sm:$0xff]
  %v69 = vld [vmem:[%s48 + $0xa0] sm:$0xff]
  %v70 = vld [vmem:[%s48 + $0xa8] sm:$0xff]
  %v71 = vld [vmem:[%s48 + $0xb0] sm:$0xff]
  %v72 = vld [vmem:[%s48 + $0xb8] sm:$0xff]
  %v73 = vld [vmem:[%s48 + $0xc0] sm:$0xff]
  %v74 = vld [vmem:[%s48 + $0xc8] sm:$0xff]
  %v75 = vld [vmem:[%s48 + $0xd0] sm:$0xff]
  %v76 = vld [vmem:[%s48 + $0xd8] sm:$0xff]
  %v77 = vld [vmem:[%s48 + $0xe0] sm:$0xff]
  %v78 = vld [vmem:[%s48 + $0xe8] sm:$0xff]
  %v79 = vld [vmem:[%s48 + $0xf0] sm:$0xff]
  %v80 = vld [vmem:[%s48 + $0xf8] sm:$0xff]
  %v81 = vld [vmem:[#allocation2] sm:$0xff]
  %v82 = vld [vmem:[#allocation2 + $0x8] sm:$0xff]
  %v83 = vld [vmem:[#allocation2 + $0x10] sm:$0xff]
  %v84 = vld [vmem:[#allocation2 + $0x18] sm:$0xff]
  %v85 = vld [vmem:[#allocation2 + $0x20] sm:$0xff]
  %v86 = vld [vmem:[#allocation2 + $0x28] sm:$0xff]
  %v87 = vld [vmem:[#allocation2 + $0x30] sm:$0xff]
  %v88 = vld [vmem:[#allocation2 + $0x38] sm:$0xff]
  %v89 = vld [vmem:[#allocation2 + $0x40] sm:$0xff]
  %v90 = vld [vmem:[#allocation2 + $0x48] sm:$0xff]
  %v91 = vld [vmem:[#allocation2 + $0x50] sm:$0xff]
  %v92 = vld [vmem:[#allocation2 + $0x58] sm:$0xff]
  %v93 = vld [vmem:[#allocation2 + $0x60] sm:$0xff]
  %v94 = vld [vmem:[#allocation2 + $0x68] sm:$0xff]
  %v95 = vld [vmem:[#allocation2 + $0x70] sm:$0xff]
  %v96 = vld [vmem:[#allocation2 + $0x78] sm:$0xff]
  %v97 = vld [vmem:[#allocation2 + $0x80] sm:$0xff]
  %v98 = vld [vmem:[#allocation2 + $0x88] sm:$0xff]
  %v99 = vld [vmem:[#allocation2 + $0x90] sm:$0xff]
  %v100 = vld [vmem:[#allocation2 + $0x98] sm:$0xff]
  %v101 = vld [vmem:[#allocation2 + $0xa0] sm:$0xff]
  %v102 = vld [vmem:[#allocation2 + $0xa8] sm:$0xff]
  %v103 = vld [vmem:[#allocation2 + $0xb0] sm:$0xff]
  %v104 = vld [vmem:[#allocation2 + $0xb8] sm:$0xff]
  %v105 = vld [vmem:[#allocation2 + $0xc0] sm:$0xff]
  %v106 = vld [vmem:[#allocation2 + $0xc8] sm:$0xff]
  %v107 = vld [vmem:[#allocation2 + $0xd0] sm:$0xff]
  %v108 = vld [vmem:[#allocation2 + $0xd8] sm:$0xff]
  %v109 = vld [vmem:[#allocation2 + $0xe0] sm:$0xff]
  %v110 = vld [vmem:[#allocation2 + $0xe8] sm:$0xff]
  %v111 = vld [vmem:[#allocation2 + $0xf0] sm:$0xff]
  %v112 = vld [vmem:[#allocation2 + $0xf8] sm:$0xff]
  %v113 = vld [vmem:[%s0] sm:$0xff]
  %v114 = vld [vmem:[%s0 + $0x8] sm:$0xff]
  %v115 = vld [vmem:[%s0 + $0x10] sm:$0xff]
  %v116 = vld [vmem:[%s0 + $0x18] sm:$0xff]
  %v117 = vld [vmem:[%s0 + $0x20] sm:$0xff]
  %v118 = vld [vmem:[%s0 + $0x28] sm:$0xff]
  %v119 = vld [vmem:[%s0 + $0x30] sm:$0xff]
  %v120 = vld [vmem:[%s0 + $0x38] sm:$0xff]
  %v121 = vld [vmem:[%s0 + $0x40] sm:$0xff]
  %v122 = vld [vmem:[%s0 + $0x48] sm:$0xff]
  %v123 = vld [vmem:[%s0 + $0x50] sm:$0xff]
  %v124 = vld [vmem:[%s0 + $0x58] sm:$0xff]
  %v125 = vld [vmem:[%s0 + $0x60] sm:$0xff]
  %v126 = vld [vmem:[%s0 + $0x68] sm:$0xff]
  %v127 = vld [vmem:[%s0 + $0x70] sm:$0xff]
  %v128 = vld [vmem:[%s0 + $0x78] sm:$0xff]
  %v129 = vld [vmem:[%s0 + $0x80] sm:$0xff]
  %v130 = vld [vmem:[%s0 + $0x88] sm:$0xff]
  %v131 = vld [vmem:[%s0 + $0x90] sm:$0xff]
  %v132 = vld [vmem:[%s0 + $0x98] sm:$0xff]
  %v133 = vld [vmem:[%s0 + $0xa0] sm:$0xff]
  %v134 = vld [vmem:[%s0 + $0xa8] sm:$0xff]
  %v135 = vld [vmem:[%s0 + $0xb0] sm:$0xff]
  %v136 = vld [vmem:[%s0 + $0xb8] sm:$0xff]
  %v137 = vld [vmem:[%s0 + $0xc0] sm:$0xff]
  %v138 = vld [vmem:[%s0 + $0xc8] sm:$0xff]
  %v139 = vld [vmem:[%s0 + $0xd0] sm:$0xff]
  %v140 = vld [vmem:[%s0 + $0xd8] sm:$0xff]
  %v141 = vld [vmem:[%s0 + $0xe0] sm:$0xff]
  %v142 = vld [vmem:[%s0 + $0xe8] sm:$0xff]
  %v143 = vld [vmem:[%s0 + $0xf0] sm:$0xff]
  %v144 = vld [vmem:[%s0 + $0xf8] sm:$0xff]
  %v145 = vld [vmem:[%s0 + $0x100] sm:$0xff]
  %v146 = vld [vmem:[%s0 + $0x108] sm:$0xff]
  %v147 = vld [vmem:[%s0 + $0x110] sm:$0xff]
  %v148 = vld [vmem:[%s0 + $0x118] sm:$0xff]
  %v149 = vld [vmem:[%s0 + $0x120] sm:$0xff]
  %v150 = vld [vmem:[%s0 + $0x128] sm:$0xff]
  %v151 = vld [vmem:[%s0 + $0x130] sm:$0xff]
  %v152 = vld [vmem:[%s0 + $0x138] sm:$0xff]
  %v153 = vld [vmem:[%s0 + $0x140] sm:$0xff]
  %v154 = vld [vmem:[%s0 + $0x148] sm:$0xff]
  %v155 = vld [vmem:[%s0 + $0x150] sm:$0xff]
  %v156 = vld [vmem:[%s0 + $0x158] sm:$0xff]
  %v157 = vld [vmem:[%s0 + $0x160] sm:$0xff]
  %v158 = vld [vmem:[%s0 + $0x168] sm:$0xff]
  %v159 = vld [vmem:[%s0 + $0x170] sm:$0xff]
  %v160 = vld [vmem:[%s0 + $0x178] sm:$0xff]
  %v161 = vld [vmem:[%s0 + $0x180] sm:$0xff]
  %v162 = vld [vmem:[%s0 + $0x188] sm:$0xff]
  %v163 = vld [vmem:[%s0 + $0x190] sm:$0xff]
  %v164 = vld [vmem:[%s0 + $0x198] sm:$0xff]
  %v165 = vld [vmem:[%s0 + $0x1a0] sm:$0xff]
  %v166 = vld [vmem:[%s0 + $0x1a8] sm:$0xff]
  %v167 = vld [vmem:[%s0 + $0x1b0] sm:$0xff]
  %v168 = vld [vmem:[%s0 + $0x1b8] sm:$0xff]
  %v169 = vld [vmem:[%s0 + $0x1c0] sm:$0xff]
  %v170 = vld [vmem:[%s0 + $0x1c8] sm:$0xff]
  %v171 = vld [vmem:[%s0 + $0x1d0] sm:$0xff]
  %v172 = vld [vmem:[%s0 + $0x1d8] sm:$0xff]
  %v173 = vld [vmem:[%s0 + $0x1e0] sm:$0xff]
  %v174 = vld [vmem:[%s0 + $0x1e8] sm:$0xff]
  %v175 = vld [vmem:[%s0 + $0x1f0] sm:$0xff]
  %v176 = vld [vmem:[%s0 + $0x1f8] sm:$0xff]
  %177 = vmatprep.subr.mxu0 0.0
  %178 = vmatpush1.msra.mxu0 %v49
  %179 = vmatprep.subr.mxu0 0.0
  %180 = vmatpush1.msra.mxu0 %v50
  %181 = vmatprep.subr.mxu0 0.0
  %182 = vmatpush1.msra.mxu0 %v51
  %183 = vmatprep.subr.mxu0 0.0
  %184 = vmatpush1.msra.mxu0 %v52
  %185 = vmatprep.subr.mxu0 0.0
  %186 = vmatpush1.msra.mxu0 %v53
  %187 = vmatprep.subr.mxu0 0.0
  %188 = vmatpush1.msra.mxu0 %v54
  %189 = vmatprep.subr.mxu0 0.0
  %190 = vmatpush1.msra.mxu0 %v55
  %191 = vmatprep.subr.mxu0 0.0
  %192 = vmatpush1.msra.mxu0 %v56
  %193 = vmatprep.subr.mxu0 0.0
  %194 = vmatpush1.msra.mxu0 %v57
  %195 = vmatprep.subr.mxu0 0.0
  %196 = vmatpush1.msra.mxu0 %v58
  %197 = vmatprep.subr.mxu0 0.0
  %198 = vmatpush1.msra.mxu0 %v59
  %199 = vmatprep.subr.mxu0 0.0
  %200 = vmatpush1.msra.mxu0 %v60
  %201 = vmatprep.subr.mxu0 0.0
  %202 = vmatpush1.msra.mxu0 %v61
  %203 = vmatprep.subr.mxu0 0.0
  %204 = vmatpush1.msra.mxu0 %v62
  %205 = vmatprep.subr.mxu0 0.0
  %206 = vmatpush1.msra.mxu0 %v63
  %207 = vmatprep.subr.mxu0 0.0
  %208 = vmatpush1.msra.mxu0 %v64
  %209 = vmatprep.subr.mxu0 0.0
  %210 = vmatpush1.msra.mxu0 %v65
  %211 = vmatprep.subr.mxu0 0.0
  %212 = vmatpush1.msra.mxu0 %v66
  %213 = vmatprep.subr.mxu0 0.0
  %214 = vmatpush1.msra.mxu0 %v67
  %215 = vmatprep.subr.mxu0 0.0
  %216 = vmatpush1.msra.mxu0 %v68
  %217 = vmatprep.subr.mxu0 0.0
  %218 = vmatpush1.msra.mxu0 %v69
  %219 = vmatprep.subr.mxu0 0.0
  %220 = vmatpush1.msra.mxu0 %v70
  %221 = vmatprep.subr.mxu0 0.0
  %222 = vmatpush1.msra.mxu0 %v71
  %223 = vmatprep.subr.mxu0 0.0
  %224 = vmatpush1.msra.mxu0 %v72
  %225 = vmatprep.subr.mxu0 0.0
  %226 = vmatpush1.msra.mxu0 %v73
  %227 = vmatprep.subr.mxu0 0.0
  %228 = vmatpush1.msra.mxu0 %v74
  %229 = vmatprep.subr.mxu0 0.0
  %230 = vmatpush1.msra.mxu0 %v75
  %231 = vmatprep.subr.mxu0 0.0
  %232 = vmatpush1.msra.mxu0 %v76
  %233 = vmatprep.subr.mxu0 0.0
  %234 = vmatpush1.msra.mxu0 %v77
  %235 = vmatprep.subr.mxu0 0.0
  %236 = vmatpush1.msra.mxu0 %v78
  %237 = vmatprep.subr.mxu0 0.0
  %238 = vmatpush1.msra.mxu0 %v79
  %239 = vmatprep.subr.mxu0 0.0
  %240 = vmatpush1.msra.mxu0 %v80
  %241 = vmatprep.mubr.f32.mxu0 %v114
  %242 = vmatmul.mubr.f32.gmra.mrb[0].mxu0 %v113
  %v243 = vpop.f32.mrb[0].mxu0
  %v244 = vadd.f32 0.0, %v243
  %v245 = vpop.f32.mrb[0].mxu0
  %246 = vmatprep.mubr.f32.mxu0 %v116
  %247 = vmatmul.mubr.f32.gmra.mrb[0].mxu0 %v115
  %v248 = vpop.f32.mrb[0].mxu0
  %v249 = vadd.f32 0.0, %v248
  %v250 = vpop.f32.mrb[0].mxu0
  %251 = vmatprep.mubr.f32.mxu0 %v118
  %252 = vmatmul.mubr.f32.gmra.mrb[0].mxu0 %v117
  %v253 = vpop.f32.mrb[0].mxu0
  %v254 = vadd.f32 0.0, %v253
  %v255 = vpop.f32.mrb[0].mxu0
  %256 = vmatprep.mubr.f32.mxu0 %v120
  %257 = vmatmul.mubr.f32.gmra.mrb[0].mxu0 %v119
  %v258 = vpop.f32.mrb[0].mxu0
  %v259 = vadd.f32 0.0, %v258
  %v260 = vpop.f32.mrb[0].mxu0
  %261 = vmatprep.mubr.f32.mxu0 %v122
  %262 = vmatmul.mubr.f32.gmra.mrb[0].mxu0 %v121
  %v263 = vpop.f32.mrb[0].mxu0
  %v264 = vadd.f32 0.0, %v263
  %v265 = vpop.f32.mrb[0].mxu0
  %266 = vmatprep.mubr.f32.mxu0 %v124
  %267 = vmatmul.mubr.f32.gmra.mrb[0].mxu0 %v123
  %v268 = vpop.f32.mrb[0].mxu0
  %v269 = vadd.f32 0.0, %v268
  %v270 = vpop.f32.mrb[0].mxu0
  %271 = vmatprep.mubr.f32.mxu0 %v126
  %272 = vmatmul.mubr.f32.gmra.mrb[0].mxu0 %v125
  %v273 = vpop.f32.mrb[0].mxu0
  %v274 = vadd.f32 0.0, %v273
  %v275 = vpop.f32.mrb[0].mxu0
  %276 = vmatprep.mubr.f32.mxu0 %v128
  %277 = vmatmul.mubr.f32.gmra.mrb[0].mxu0 %v127
  %v278 = vpop.f32.mrb[0].mxu0
  %v279 = vadd.f32 0.0, %v278
  %v280 = vpop.f32.mrb[0].mxu0
  %281 = vmatprep.mubr.f32.mxu0 %v130
  %282 = vmatmul.mubr.f32.gmra.mrb[0].mxu0 %v129
  %v283 = vpop.f32.mrb[0].mxu0
  %v284 = vadd.f32 0.0, %v283
  %v285 = vpop.f32.mrb[0].mxu0
  %286 = vmatprep.mubr.f32.mxu0 %v132
  %287 = vmatmul.mubr.f32.gmra.mrb[0].mxu0 %v131
  %v288 = vpop.f32.mrb[0].mxu0
  %v289 = vadd.f32 0.0, %v288
  %v290 = vpop.f32.mrb[0].mxu0
  %291 = vmatprep.mubr.f32.mxu0 %v134
  %292 = vmatmul.mubr.f32.gmra.mrb[0].mxu0 %v133
  %v293 = vpop.f32.mrb[0].mxu0
  %v294 = vadd.f32 0.0, %v293
  %v295 = vpop.f32.mrb[0].mxu0
  %296 = vmatprep.mubr.f32.mxu0 %v136
  %297 = vmatmul.mubr.f32.gmra.mrb[0].mxu0 %v135
  %v298 = vpop.f32.mrb[0].mxu0
  %v299 = vadd.f32 0.0, %v298
  %v300 = vpop.f32.mrb[0].mxu0
  %301 = vmatprep.mubr.f32.mxu0 %v138
  %302 = vmatmul.mubr.f32.gmra.mrb[0].mxu0 %v137
  %v303 = vpop.f32.mrb[0].mxu0
  %v304 = vadd.f32 0.0, %v303
  %v305 = vpop.f32.mrb[0].mxu0
  %306 = vmatprep.mubr.f32.mxu0 %v140
  %307 = vmatmul.mubr.f32.gmra.mrb[0].mxu0 %v139
  %v308 = vpop.f32.mrb[0].mxu0
  %v309 = vadd.f32 0.0, %v308
  %v310 = vpop.f32.mrb[0].mxu0
  %311 = vmatprep.mubr.f32.mxu0 %v142
  %312 = vmatmul.mubr.f32.gmra.mrb[0].mxu0 %v141
  %v313 = vpop.f32.mrb[0].mxu0
  %v314 = vadd.f32 0.0, %v313
  %v315 = vpop.f32.mrb[0].mxu0
  %316 = vmatprep.mubr.f32.mxu0 %v144
  %317 = vmatmul.mubr.f32.gmra.mrb[0].mxu0 %v143
  %v318 = vpop.f32.mrb[0].mxu0
  %v319 = vadd.f32 0.0, %v318
  %v320 = vpop.f32.mrb[0].mxu0
  %321 = vmatprep.mubr.f32.mxu0 %v146
  %322 = vmatmul.mubr.f32.gmra.mrb[0].mxu0 %v145
  %v323 = vpop.f32.mrb[0].mxu0
  %v324 = vadd.f32 0.0, %v323
  %v325 = vpop.f32.mrb[0].mxu0
  %326 = vmatprep.mubr.f32.mxu0 %v148
  %327 = vmatmul.mubr.f32.gmra.mrb[0].mxu0 %v147
  %v328 = vpop.f32.mrb[0].mxu0
  %v329 = vadd.f32 0.0, %v328
  %v330 = vpop.f32.mrb[0].mxu0
  %331 = vmatprep.mubr.f32.mxu0 %v150
  %332 = vmatmul.mubr.f32.gmra.mrb[0].mxu0 %v149
  %v333 = vpop.f32.mrb[0].mxu0
  %v334 = vadd.f32 0.0, %v333
  %v335 = vpop.f32.mrb[0].mxu0
  %336 = vmatprep.mubr.f32.mxu0 %v152
  %337 = vmatmul.mubr.f32.gmra.mrb[0].mxu0 %v151
  %v338 = vpop.f32.mrb[0].mxu0
  %v339 = vadd.f32 0.0, %v338
  %v340 = vpop.f32.mrb[0].mxu0
  %341 = vmatprep.mubr.f32.mxu0 %v154
  %342 = vmatmul.mubr.f32.gmra.mrb[0].mxu0 %v153
  %v343 = vpop.f32.mrb[0].mxu0
  %v344 = vadd.f32 0.0, %v343
  %v345 = vpop.f32.mrb[0].mxu0
  %346 = vmatprep.mubr.f32.mxu0 %v156
  %347 = vmatmul.mubr.f32.gmra.mrb[0].mxu0 %v155
  %v348 = vpop.f32.mrb[0].mxu0
  %v349 = vadd.f32 0.0, %v348
  %v350 = vpop.f32.mrb[0].mxu0
  %351 = vmatprep.mubr.f32.mxu0 %v158
  %352 = vmatmul.mubr.f32.gmra.mrb[0].mxu0 %v157
  %v353 = vpop.f32.mrb[0].mxu0
  %v354 = vadd.f32 0.0, %v353
  %v355 = vpop.f32.mrb[0].mxu0
  %356 = vmatprep.mubr.f32.mxu0 %v160
  %357 = vmatmul.mubr.f32.gmra.mrb[0].mxu0 %v159
  %v358 = vpop.f32.mrb[0].mxu0
  %v359 = vadd.f32 0.0, %v358
  %v360 = vpop.f32.mrb[0].mxu0
  %361 = vmatprep.mubr.f32.mxu0 %v162
  %362 = vmatmul.mubr.f32.gmra.mrb[0].mxu0 %v161
  %v363 = vpop.f32.mrb[0].mxu0
  %v364 = vadd.f32 0.0, %v363
  %v365 = vpop.f32.mrb[0].mxu0
  %366 = vmatprep.mubr.f32.mxu0 %v164
  %367 = vmatmul.mubr.f32.gmra.mrb[0].mxu0 %v163
  %v368 = vpop.f32.mrb[0].mxu0
  %v369 = vadd.f32 0.0, %v368
  %v370 = vpop.f32.mrb[0].mxu0
  %371 = vmatprep.mubr.f32.mxu0 %v166
  %372 = vmatmul.mubr.f32.gmra.mrb[0].mxu0 %v165
  %v373 = vpop.f32.mrb[0].mxu0
  %v374 = vadd.f32 0.0, %v373
  %v375 = vpop.f32.mrb[0].mxu0
  %376 = vmatprep.mubr.f32.mxu0 %v168
  %377 = vmatmul.mubr.f32.gmra.mrb[0].mxu0 %v167
  %v378 = vpop.f32.mrb[0].mxu0
  %v379 = vadd.f32 0.0, %v378
  %v380 = vpop.f32.mrb[0].mxu0
  %381 = vmatprep.mubr.f32.mxu0 %v170
  %382 = vmatmul.mubr.f32.gmra.mrb[0].mxu0 %v169
  %v383 = vpop.f32.mrb[0].mxu0
  %v384 = vadd.f32 0.0, %v383
  %v385 = vpop.f32.mrb[0].mxu0
  %386 = vmatprep.mubr.f32.mxu0 %v172
  %387 = vmatmul.mubr.f32.gmra.mrb[0].mxu0 %v171
  %v388 = vpop.f32.mrb[0].mxu0
  %v389 = vadd.f32 0.0, %v388
  %v390 = vpop.f32.mrb[0].mxu0
  %391 = vmatprep.mubr.f32.mxu0 %v174
  %392 = vmatmul.mubr.f32.gmra.mrb[0].mxu0 %v173
  %v393 = vpop.f32.mrb[0].mxu0
  %v394 = vadd.f32 0.0, %v393
  %v395 = vpop.f32.mrb[0].mxu0
  %396 = vmatprep.mubr.f32.mxu0 %v176
  %397 = vmatmul.mubr.f32.gmra.mrb[0].mxu0 %v175
  %v398 = vpop.f32.mrb[0].mxu0
  %v399 = vadd.f32 0.0, %v398
  %v400 = vpop.f32.mrb[0].mxu0
  %401 = vdwg.mxu0
  %v402 = vadd.f32 %v81, %v244
  %v403 = vadd.f32 %v82, %v249
  %v404 = vadd.f32 %v83, %v254
  %v405 = vadd.f32 %v84, %v259
  %v406 = vadd.f32 %v85, %v264
  %v407 = vadd.f32 %v86, %v269
  %v408 = vadd.f32 %v87, %v274
  %v409 = vadd.f32 %v88, %v279
  %v410 = vadd.f32 %v89, %v284
  %v411 = vadd.f32 %v90, %v289
  %v412 = vadd.f32 %v91, %v294
  %v413 = vadd.f32 %v92, %v299
  %v414 = vadd.f32 %v93, %v304
  %v415 = vadd.f32 %v94, %v309
  %v416 = vadd.f32 %v95, %v314
  %v417 = vadd.f32 %v96, %v319
  %v418 = vadd.f32 %v97, %v324
  %v419 = vadd.f32 %v98, %v329
  %v420 = vadd.f32 %v99, %v334
  %v421 = vadd.f32 %v100, %v339
  %v422 = vadd.f32 %v101, %v344
  %v423 = vadd.f32 %v102, %v349
  %v424 = vadd.f32 %v103, %v354
  %v425 = vadd.f32 %v104, %v359
  %v426 = vadd.f32 %v105, %v364
  %v427 = vadd.f32 %v106, %v369
  %v428 = vadd.f32 %v107, %v374
  %v429 = vadd.f32 %v108, %v379
  %v430 = vadd.f32 %v109, %v384
  %v431 = vadd.f32 %v110, %v389
  %v432 = vadd.f32 %v111, %v394
  %v433 = vadd.f32 %v112, %v399
  %434 = vst [vmem:[#allocation2] sm:$0xff] %v402
  %435 = vst [vmem:[#allocation2 + $0x8] sm:$0xff] %v403
  %436 = vst [vmem:[#allocation2 + $0x10] sm:$0xff] %v404
  %437 = vst [vmem:[#allocation2 + $0x18] sm:$0xff] %v405
  %438 = vst [vmem:[#allocation2 + $0x20] sm:$0xff] %v406
  %439 = vst [vmem:[#allocation2 + $0x28] sm:$0xff] %v407
  %440 = vst [vmem:[#allocation2 + $0x30] sm:$0xff] %v408
  %441 = vst [vmem:[#allocation2 + $0x38] sm:$0xff] %v409
  %442 = vst [vmem:[#allocation2 + $0x40] sm:$0xff] %v410
  %443 = vst [vmem:[#allocation2 + $0x48] sm:$0xff] %v411
  %444 = vst [vmem:[#allocation2 + $0x50] sm:$0xff] %v412
  %445 = vst [vmem:[#allocation2 + $0x58] sm:$0xff] %v413
  %446 = vst [vmem:[#allocation2 + $0x60] sm:$0xff] %v414
  %447 = vst [vmem:[#allocation2 + $0x68] sm:$0xff] %v415
  %448 = vst [vmem:[#allocation2 + $0x70] sm:$0xff] %v416
  %449 = vst [vmem:[#allocation2 + $0x78] sm:$0xff] %v417
  %450 = vst [vmem:[#allocation2 + $0x80] sm:$0xff] %v418
  %451 = vst [vmem:[#allocation2 + $0x88] sm:$0xff] %v419
  %452 = vst [vmem:[#allocation2 + $0x90] sm:$0xff] %v420
  %453 = vst [vmem:[#allocation2 + $0x98] sm:$0xff] %v421
  %454 = vst [vmem:[#allocation2 + $0xa0] sm:$0xff] %v422
  %455 = vst [vmem:[#allocation2 + $0xa8] sm:$0xff] %v423
  %456 = vst [vmem:[#allocation2 + $0xb0] sm:$0xff] %v424
  %457 = vst [vmem:[#allocation2 + $0xb8] sm:$0xff] %v425
  %458 = vst [vmem:[#allocation2 + $0xc0] sm:$0xff] %v426
  %459 = vst [vmem:[#allocation2 + $0xc8] sm:$0xff] %v427
  %460 = vst [vmem:[#allocation2 + $0xd0] sm:$0xff] %v428
  %461 = vst [vmem:[#allocation2 + $0xd8] sm:$0xff] %v429
  %462 = vst [vmem:[#allocation2 + $0xe0] sm:$0xff] %v430
  %463 = vst [vmem:[#allocation2 + $0xe8] sm:$0xff] %v431
  %464 = vst [vmem:[#allocation2 + $0xf0] sm:$0xff] %v432
  %465 = vst [vmem:[#allocation2 + $0xf8] sm:$0xff] %v433
  // Predicated region
  $region14: #{gae_forward.8} parent=0 // pred_check
    %p466 = pneg %p11
  $region15: #{gae_forward.8} parent=0 // pred_check_branch
    %468 = sbr.rel (%p466) target = $region17
  $region16: #{gae_forward.8} parent=0 // pred_region
    %v469 = vld [vmem:[#allocation2] sm:$0xff]
    %v470 = vld [vmem:[#allocation2 + $0x8] sm:$0xff]
    %v471 = vld [vmem:[#allocation2 + $0x10] sm:$0xff]
    %v472 = vld [vmem:[#allocation2 + $0x18] sm:$0xff]
    %v473 = vld [vmem:[#allocation2 + $0x20] sm:$0xff]
    %v474 = vld [vmem:[#allocation2 + $0x28] sm:$0xff]
    %v475 = vld [vmem:[#allocation2 + $0x30] sm:$0xff]
    %v476 = vld [vmem:[#allocation2 + $0x38] sm:$0xff]
    %v477 = vld [vmem:[#allocation2 + $0x40] sm:$0xff]
    %v478 = vld [vmem:[#allocation2 + $0x48] sm:$0xff]
    %v479 = vld [vmem:[#allocation2 + $0x50] sm:$0xff]
    %v480 = vld [vmem:[#allocation2 + $0x58] sm:$0xff]
    %v481 = vld [vmem:[#allocation2 + $0x60] sm:$0xff]
    %v482 = vld [vmem:[#allocation2 + $0x68] sm:$0xff]
    %v483 = vld [vmem:[#allocation2 + $0x70] sm:$0xff]
    %v484 = vld [vmem:[#allocation2 + $0x78] sm:$0xff]
    %v485 = vld [vmem:[#allocation2 + $0x80] sm:$0xff]
    %v486 = vld [vmem:[#allocation2 + $0x88] sm:$0xff]
    %v487 = vld [vmem:[#allocation2 + $0x90] sm:$0xff]
    %v488 = vld [vmem:[#allocation2 + $0x98] sm:$0xff]
    %v489 = vld [vmem:[#allocation2 + $0xa0] sm:$0xff]
    %v490 = vld [vmem:[#allocation2 + $0xa8] sm:$0xff]
    %v491 = vld [vmem:[#allocation2 + $0xb0] sm:$0xff]
    %v492 = vld [vmem:[#allocation2 + $0xb8] sm:$0xff]
    %v493 = vld [vmem:[#allocation2 + $0xc0] sm:$0xff]
    %v494 = vld [vmem:[#allocation2 + $0xc8] sm:$0xff]
    %v495 = vld [vmem:[#allocation2 + $0xd0] sm:$0xff]
    %v496 = vld [vmem:[#allocation2 + $0xd8] sm:$0xff]
    %v497 = vld [vmem:[#allocation2 + $0xe0] sm:$0xff]
    %v498 = vld [vmem:[#allocation2 + $0xe8] sm:$0xff]
    %v499 = vld [vmem:[#allocation2 + $0xf0] sm:$0xff]
    %v500 = vld [vmem:[#allocation2 + $0xf8] sm:$0xff]
    %501 = vst [vmem:[%s2] sm:$0xff] %v469
    %502 = vst [vmem:[%s2 + $0x8] sm:$0xff] %v470
    %503 = vst [vmem:[%s2 + $0x10] sm:$0xff] %v471
    %504 = vst [vmem:[%s2 + $0x18] sm:$0xff] %v472
    %505 = vst [vmem:[%s2 + $0x20] sm:$0xff] %v473
    %506 = vst [vmem:[%s2 + $0x28] sm:$0xff] %v474
    %507 = vst [vmem:[%s2 + $0x30] sm:$0xff] %v475
    %508 = vst [vmem:[%s2 + $0x38] sm:$0xff] %v476
    %509 = vst [vmem:[%s2 + $0x40] sm:$0xff] %v477
    %510 = vst [vmem:[%s2 + $0x48] sm:$0xff] %v478
    %511 = vst [vmem:[%s2 + $0x50] sm:$0xff] %v479
    %512 = vst [vmem:[%s2 + $0x58] sm:$0xff] %v480
    %513 = vst [vmem:[%s2 + $0x60] sm:$0xff] %v481
    %514 = vst [vmem:[%s2 + $0x68] sm:$0xff] %v482
    %515 = vst [vmem:[%s2 + $0x70] sm:$0xff] %v483
    %516 = vst [vmem:[%s2 + $0x78] sm:$0xff] %v484
    %517 = vst [vmem:[%s2 + $0x80] sm:$0xff] %v485
    %518 = vst [vmem:[%s2 + $0x88] sm:$0xff] %v486
    %519 = vst [vmem:[%s2 + $0x90] sm:$0xff] %v487
    %520 = vst [vmem:[%s2 + $0x98] sm:$0xff] %v488
    %521 = vst [vmem:[%s2 + $0xa0] sm:$0xff] %v489
    %522 = vst [vmem:[%s2 + $0xa8] sm:$0xff] %v490
    %523 = vst [vmem:[%s2 + $0xb0] sm:$0xff] %v491
    %524 = vst [vmem:[%s2 + $0xb8] sm:$0xff] %v492
    %525 = vst [vmem:[%s2 + $0xc0] sm:$0xff] %v493
    %526 = vst [vmem:[%s2 + $0xc8] sm:$0xff] %v494
    %527 = vst [vmem:[%s2 + $0xd0] sm:$0xff] %v495
    %528 = vst [vmem:[%s2 + $0xd8] sm:$0xff] %v496
    %529 = vst [vmem:[%s2 + $0xe0] sm:$0xff] %v497
    %530 = vst [vmem:[%s2 + $0xe8] sm:$0xff] %v498
    %531 = vst [vmem:[%s2 + $0xf0] sm:$0xff] %v499
    %532 = vst [vmem:[%s2 + $0xf8] sm:$0xff] %v500
  $region17: #{gae_forward.8} parent=0 // pred_fallthru
    _
  // Predicated region
  $region18: #{gae_forward.8} parent=0 // pred_check
    _
  $region19: #{gae_forward.8} parent=0 // pred_check_branch
    %534 = sbr.rel (0) target = $region21
  $region20: #{gae_forward.8} parent=0 // pred_region
    _
  $region21: #{gae_forward.8} parent=0 // pred_fallthru
    _
  // Predicated region
  $region22: #{gae_forward.8} parent=0 // pred_check
    _
  $region23: #{gae_forward.8} parent=0 // pred_check_branch
    %536 = sbr.rel (0) target = $region25
  $region24: #{gae_forward.8} parent=0 // pred_region
    _
  $region25: #{gae_forward.8} parent=0 // pred_fallthru
    _

// kernel: gae_forward.9
$region0: #{gae_forward.9}
  #allocation0 [shape = 'u32[]', space=smem, size = 0x4, offset = 0x4, fixed_abs, tag = 'smem constant byte address 0x4 - core index']
  #allocation1 [shape = 'u32[144,128]{1,0:T(1,128)}', space=vmem, size = 0x12000, scoped, tag = 'internal scratch']
  %s0 = inlined_call_operand.vmem [shape: f32[256,128], index: 0, kind: input, shape index: {}]
  %s1 = inlined_call_operand.vmem [shape: f32[256,256], index: 1, kind: output, shape index: {}]
  %s2 = sld [smem:[#allocation0]]
  $region14: #{gae_forward.9} parent=0
    _
  %s4 = ssub.s32 1, %s2
  %s5 = scalar_select 0, %s4, %s2
  // Predicated region
  $region2: #{gae_forward.9} parent=0 // pred_check
    _
  $region3: #{gae_forward.9} parent=0 // pred_check_branch
    %7 = sbr.rel (0) target = $region5
  $region4: #{gae_forward.9} parent=0 // pred_region
    _
  $region5: #{gae_forward.9} parent=0 // pred_fallthru
    _
  %s8 = smul.u32 0, 256
  %s9 = scalar_lea.vmem %s0, %s8
  %v10 = vld [vmem:[%s9] sm:$0xff]
  %v11 = vld [vmem:[%s9 + $0x8] sm:$0xff]
  %v12 = vld [vmem:[%s9 + $0x10] sm:$0xff]
  %v13 = vld [vmem:[%s9 + $0x18] sm:$0xff]
  %v14 = vld [vmem:[%s9 + $0x20] sm:$0xff]
  %v15 = vld [vmem:[%s9 + $0x28] sm:$0xff]
  %v16 = vld [vmem:[%s9 + $0x30] sm:$0xff]
  %v17 = vld [vmem:[%s9 + $0x38] sm:$0xff]
  %v18 = vld [vmem:[%s9 + $0x40] sm:$0xff]
  %v19 = vld [vmem:[%s9 + $0x48] sm:$0xff]
  %v20 = vld [vmem:[%s9 + $0x50] sm:$0xff]
  %v21 = vld [vmem:[%s9 + $0x58] sm:$0xff]
  %v22 = vld [vmem:[%s9 + $0x60] sm:$0xff]
  %v23 = vld [vmem:[%s9 + $0x68] sm:$0xff]
  %v24 = vld [vmem:[%s9 + $0x70] sm:$0xff]
  %v25 = vld [vmem:[%s9 + $0x78] sm:$0xff]
  %v26 = vld [vmem:[%s9 + $0x80] sm:$0xff]
  %v27 = vld [vmem:[%s9 + $0x88] sm:$0xff]
  %v28 = vld [vmem:[%s9 + $0x90] sm:$0xff]
  %v29 = vld [vmem:[%s9 + $0x98] sm:$0xff]
  %v30 = vld [vmem:[%s9 + $0xa0] sm:$0xff]
  %v31 = vld [vmem:[%s9 + $0xa8] sm:$0xff]
  %v32 = vld [vmem:[%s9 + $0xb0] sm:$0xff]
  %v33 = vld [vmem:[%s9 + $0xb8] sm:$0xff]
  %v34 = vld [vmem:[%s9 + $0xc0] sm:$0xff]
  %v35 = vld [vmem:[%s9 + $0xc8] sm:$0xff]
  %v36 = vld [vmem:[%s9 + $0xd0] sm:$0xff]
  %v37 = vld [vmem:[%s9 + $0xd8] sm:$0xff]
  %v38 = vld [vmem:[%s9 + $0xe0] sm:$0xff]
  %v39 = vld [vmem:[%s9 + $0xe8] sm:$0xff]
  %v40 = vld [vmem:[%s9 + $0xf0] sm:$0xff]
  %v41 = vld [vmem:[%s9 + $0xf8] sm:$0xff]
  %s42 = smul.u32 0, 256
  %s43 = scalar_lea.vmem %s0, %s42
  %v44 = vld [vmem:[%s43] sm:$0xff]
  %v45 = vld [vmem:[%s43 + $0x8] sm:$0xff]
  %v46 = vld [vmem:[%s43 + $0x10] sm:$0xff]
  %v47 = vld [vmem:[%s43 + $0x18] sm:$0xff]
  %v48 = vld [vmem:[%s43 + $0x20] sm:$0xff]
  %v49 = vld [vmem:[%s43 + $0x28] sm:$0xff]
  %v50 = vld [vmem:[%s43 + $0x30] sm:$0xff]
  %v51 = vld [vmem:[%s43 + $0x38] sm:$0xff]
  %v52 = vld [vmem:[%s43 + $0x40] sm:$0xff]
  %v53 = vld [vmem:[%s43 + $0x48] sm:$0xff]
  %v54 = vld [vmem:[%s43 + $0x50] sm:$0xff]
  %v55 = vld [vmem:[%s43 + $0x58] sm:$0xff]
  %v56 = vld [vmem:[%s43 + $0x60] sm:$0xff]
  %v57 = vld [vmem:[%s43 + $0x68] sm:$0xff]
  %v58 = vld [vmem:[%s43 + $0x70] sm:$0xff]
  %v59 = vld [vmem:[%s43 + $0x78] sm:$0xff]
  %v60 = vld [vmem:[%s43 + $0x80] sm:$0xff]
  %v61 = vld [vmem:[%s43 + $0x88] sm:$0xff]
  %v62 = vld [vmem:[%s43 + $0x90] sm:$0xff]
  %v63 = vld [vmem:[%s43 + $0x98] sm:$0xff]
  %v64 = vld [vmem:[%s43 + $0xa0] sm:$0xff]
  %v65 = vld [vmem:[%s43 + $0xa8] sm:$0xff]
  %v66 = vld [vmem:[%s43 + $0xb0] sm:$0xff]
  %v67 = vld [vmem:[%s43 + $0xb8] sm:$0xff]
  %v68 = vld [vmem:[%s43 + $0xc0] sm:$0xff]
  %v69 = vld [vmem:[%s43 + $0xc8] sm:$0xff]
  %v70 = vld [vmem:[%s43 + $0xd0] sm:$0xff]
  %v71 = vld [vmem:[%s43 + $0xd8] sm:$0xff]
  %v72 = vld [vmem:[%s43 + $0xe0] sm:$0xff]
  %v73 = vld [vmem:[%s43 + $0xe8] sm:$0xff]
  %v74 = vld [vmem:[%s43 + $0xf0] sm:$0xff]
  %v75 = vld [vmem:[%s43 + $0xf8] sm:$0xff]
  %76 = vmatprep.subr.mxu0 0.0
  %77 = vmatpush1.xpose.msra.mxu0 %v44
  %78 = vmatprep.subr.mxu0 0.0
  %79 = vmatpush1.xpose.msra.mxu0 %v45
  %80 = vmatprep.subr.mxu0 0.0
  %81 = vmatpush1.xpose.msra.mxu0 %v46
  %82 = vmatprep.subr.mxu0 0.0
  %83 = vmatpush1.xpose.msra.mxu0 %v47
  %84 = vmatprep.subr.mxu0 0.0
  %85 = vmatpush1.xpose.msra.mxu0 %v48
  %86 = vmatprep.subr.mxu0 0.0
  %87 = vmatpush1.xpose.msra.mxu0 %v49
  %88 = vmatprep.subr.mxu0 0.0
  %89 = vmatpush1.xpose.msra.mxu0 %v50
  %90 = vmatprep.subr.mxu0 0.0
  %91 = vmatpush1.xpose.msra.mxu0 %v51
  %92 = vmatprep.subr.mxu0 0.0
  %93 = vmatpush1.xpose.msra.mxu0 %v52
  %94 = vmatprep.subr.mxu0 0.0
  %95 = vmatpush1.xpose.msra.mxu0 %v53
  %96 = vmatprep.subr.mxu0 0.0
  %97 = vmatpush1.xpose.msra.mxu0 %v54
  %98 = vmatprep.subr.mxu0 0.0
  %99 = vmatpush1.xpose.msra.mxu0 %v55
  %100 = vmatprep.subr.mxu0 0.0
  %101 = vmatpush1.xpose.msra.mxu0 %v56
  %102 = vmatprep.subr.mxu0 0.0
  %103 = vmatpush1.xpose.msra.mxu0 %v57
  %104 = vmatprep.subr.mxu0 0.0
  %105 = vmatpush1.xpose.msra.mxu0 %v58
  %106 = vmatprep.subr.mxu0 0.0
  %107 = vmatpush1.xpose.msra.mxu0 %v59
  %108 = vmatprep.subr.mxu0 0.0
  %109 = vmatpush1.xpose.msra.mxu0 %v60
  %110 = vmatprep.subr.mxu0 0.0
  %111 = vmatpush1.xpose.msra.mxu0 %v61
  %112 = vmatprep.subr.mxu0 0.0
  %113 = vmatpush1.xpose.msra.mxu0 %v62
  %114 = vmatprep.subr.mxu0 0.0
  %115 = vmatpush1.xpose.msra.mxu0 %v63
  %116 = vmatprep.subr.mxu0 0.0
  %117 = vmatpush1.xpose.msra.mxu0 %v64
  %118 = vmatprep.subr.mxu0 0.0
  %119 = vmatpush1.xpose.msra.mxu0 %v65
  %120 = vmatprep.subr.mxu0 0.0
  %121 = vmatpush1.xpose.msra.mxu0 %v66
  %122 = vmatprep.subr.mxu0 0.0
  %123 = vmatpush1.xpose.msra.mxu0 %v67
  %124 = vmatprep.subr.mxu0 0.0
  %125 = vmatpush1.xpose.msra.mxu0 %v68
  %126 = vmatprep.subr.mxu0 0.0
  %127 = vmatpush1.xpose.msra.mxu0 %v69
  %128 = vmatprep.subr.mxu0 0.0
  %129 = vmatpush1.xpose.msra.mxu0 %v70
  %130 = vmatprep.subr.mxu0 0.0
  %131 = vmatpush1.xpose.msra.mxu0 %v71
  %132 = vmatprep.subr.mxu0 0.0
  %133 = vmatpush1.xpose.msra.mxu0 %v72
  %134 = vmatprep.subr.mxu0 0.0
  %135 = vmatpush1.xpose.msra.mxu0 %v73
  %136 = vmatprep.subr.mxu0 0.0
  %137 = vmatpush1.xpose.msra.mxu0 %v74
  %138 = vmatprep.subr.mxu0 0.0
  %139 = vmatpush1.xpose.msra.mxu0 %v75
  %140 = vmatprep.mubr.f32.mxu0 0.0
  %141 = vmatmul.mubr.f32.gmra.mrb[0].mxu0 %v10
  %v142 = vpop.f32.mrb[0].mxu0
  %v143 = vadd.f32 0.0, %v142
  %v144 = vpop.f32.mrb[0].mxu0
  %v145 = vadd.f32 0.0, %v144
  %146 = vmatprep.mubr.f32.mxu0 0.0
  %147 = vmatmul.mubr.f32.gmra.mrb[0].mxu0 %v11
  %v148 = vpop.f32.mrb[0].mxu0
  %v149 = vadd.f32 0.0, %v148
  %v150 = vpop.f32.mrb[0].mxu0
  %v151 = vadd.f32 0.0, %v150
  %152 = vmatprep.mubr.f32.mxu0 0.0
  %153 = vmatmul.mubr.f32.gmra.mrb[0].mxu0 %v12
  %v154 = vpop.f32.mrb[0].mxu0
  %v155 = vadd.f32 0.0, %v154
  %v156 = vpop.f32.mrb[0].mxu0
  %v157 = vadd.f32 0.0, %v156
  %158 = vmatprep.mubr.f32.mxu0 0.0
  %159 = vmatmul.mubr.f32.gmra.mrb[0].mxu0 %v13
  %v160 = vpop.f32.mrb[0].mxu0
  %v161 = vadd.f32 0.0, %v160
  %v162 = vpop.f32.mrb[0].mxu0
  %v163 = vadd.f32 0.0, %v162
  %164 = vmatprep.mubr.f32.mxu0 0.0
  %165 = vmatmul.mubr.f32.gmra.mrb[0].mxu0 %v14
  %v166 = vpop.f32.mrb[0].mxu0
  %v167 = vadd.f32 0.0, %v166
  %v168 = vpop.f32.mrb[0].mxu0
  %v169 = vadd.f32 0.0, %v168
  %170 = vmatprep.mubr.f32.mxu0 0.0
  %171 = vmatmul.mubr.f32.gmra.mrb[0].mxu0 %v15
  %v172 = vpop.f32.mrb[0].mxu0
  %v173 = vadd.f32 0.0, %v172
  %v174 = vpop.f32.mrb[0].mxu0
  %v175 = vadd.f32 0.0, %v174
  %176 = vmatprep.mubr.f32.mxu0 0.0
  %177 = vmatmul.mubr.f32.gmra.mrb[0].mxu0 %v16
  %v178 = vpop.f32.mrb[0].mxu0
  %v179 = vadd.f32 0.0, %v178
  %v180 = vpop.f32.mrb[0].mxu0
  %v181 = vadd.f32 0.0, %v180
  %182 = vmatprep.mubr.f32.mxu0 0.0
  %183 = vmatmul.mubr.f32.gmra.mrb[0].mxu0 %v17
  %v184 = vpop.f32.mrb[0].mxu0
  %v185 = vadd.f32 0.0, %v184
  %v186 = vpop.f32.mrb[0].mxu0
  %v187 = vadd.f32 0.0, %v186
  %188 = vmatprep.mubr.f32.mxu0 0.0
  %189 = vmatmul.mubr.f32.gmra.mrb[0].mxu0 %v18
  %v190 = vpop.f32.mrb[0].mxu0
  %v191 = vadd.f32 0.0, %v190
  %v192 = vpop.f32.mrb[0].mxu0
  %v193 = vadd.f32 0.0, %v192
  %194 = vmatprep.mubr.f32.mxu0 0.0
  %195 = vmatmul.mubr.f32.gmra.mrb[0].mxu0 %v19
  %v196 = vpop.f32.mrb[0].mxu0
  %v197 = vadd.f32 0.0, %v196
  %v198 = vpop.f32.mrb[0].mxu0
  %v199 = vadd.f32 0.0, %v198
  %200 = vmatprep.mubr.f32.mxu0 0.0
  %201 = vmatmul.mubr.f32.gmra.mrb[0].mxu0 %v20
  %v202 = vpop.f32.mrb[0].mxu0
  %v203 = vadd.f32 0.0, %v202
  %v204 = vpop.f32.mrb[0].mxu0
  %v205 = vadd.f32 0.0, %v204
  %206 = vmatprep.mubr.f32.mxu0 0.0
  %207 = vmatmul.mubr.f32.gmra.mrb[0].mxu0 %v21
  %v208 = vpop.f32.mrb[0].mxu0
  %v209 = vadd.f32 0.0, %v208
  %v210 = vpop.f32.mrb[0].mxu0
  %v211 = vadd.f32 0.0, %v210
  %212 = vmatprep.mubr.f32.mxu0 0.0
  %213 = vmatmul.mubr.f32.gmra.mrb[0].mxu0 %v22
  %v214 = vpop.f32.mrb[0].mxu0
  %v215 = vadd.f32 0.0, %v214
  %v216 = vpop.f32.mrb[0].mxu0
  %v217 = vadd.f32 0.0, %v216
  %218 = vmatprep.mubr.f32.mxu0 0.0
  %219 = vmatmul.mubr.f32.gmra.mrb[0].mxu0 %v23
  %v220 = vpop.f32.mrb[0].mxu0
  %v221 = vadd.f32 0.0, %v220
  %v222 = vpop.f32.mrb[0].mxu0
  %v223 = vadd.f32 0.0, %v222
  %224 = vmatprep.mubr.f32.mxu0 0.0
  %225 = vmatmul.mubr.f32.gmra.mrb[0].mxu0 %v24
  %v226 = vpop.f32.mrb[0].mxu0
  %v227 = vadd.f32 0.0, %v226
  %v228 = vpop.f32.mrb[0].mxu0
  %v229 = vadd.f32 0.0, %v228
  %230 = vmatprep.mubr.f32.mxu0 0.0
  %231 = vmatmul.mubr.f32.gmra.mrb[0].mxu0 %v25
  %v232 = vpop.f32.mrb[0].mxu0
  %v233 = vadd.f32 0.0, %v232
  %v234 = vpop.f32.mrb[0].mxu0
  %v235 = vadd.f32 0.0, %v234
  %236 = vmatprep.mubr.f32.mxu0 0.0
  %237 = vmatmul.mubr.f32.gmra.mrb[0].mxu0 %v26
  %v238 = vpop.f32.mrb[0].mxu0
  %v239 = vadd.f32 0.0, %v238
  %v240 = vpop.f32.mrb[0].mxu0
  %v241 = vadd.f32 0.0, %v240
  %242 = vmatprep.mubr.f32.mxu0 0.0
  %243 = vmatmul.mubr.f32.gmra.mrb[0].mxu0 %v27
  %v244 = vpop.f32.mrb[0].mxu0
  %v245 = vadd.f32 0.0, %v244
  %v246 = vpop.f32.mrb[0].mxu0
  %v247 = vadd.f32 0.0, %v246
  %248 = vmatprep.mubr.f32.mxu0 0.0
  %249 = vmatmul.mubr.f32.gmra.mrb[0].mxu0 %v28
  %v250 = vpop.f32.mrb[0].mxu0
  %v251 = vadd.f32 0.0, %v250
  %v252 = vpop.f32.mrb[0].mxu0
  %v253 = vadd.f32 0.0, %v252
  %254 = vmatprep.mubr.f32.mxu0 0.0
  %255 = vmatmul.mubr.f32.gmra.mrb[0].mxu0 %v29
  %v256 = vpop.f32.mrb[0].mxu0
  %v257 = vadd.f32 0.0, %v256
  %v258 = vpop.f32.mrb[0].mxu0
  %v259 = vadd.f32 0.0, %v258
  %260 = vmatprep.mubr.f32.mxu0 0.0
  %261 = vmatmul.mubr.f32.gmra.mrb[0].mxu0 %v30
  %v262 = vpop.f32.mrb[0].mxu0
  %v263 = vadd.f32 0.0, %v262
  %v264 = vpop.f32.mrb[0].mxu0
  %v265 = vadd.f32 0.0, %v264
  %266 = vmatprep.mubr.f32.mxu0 0.0
  %267 = vmatmul.mubr.f32.gmra.mrb[0].mxu0 %v31
  %v268 = vpop.f32.mrb[0].mxu0
  %v269 = vadd.f32 0.0, %v268
  %v270 = vpop.f32.mrb[0].mxu0
  %v271 = vadd.f32 0.0, %v270
  %272 = vmatprep.mubr.f32.mxu0 0.0
  %273 = vmatmul.mubr.f32.gmra.mrb[0].mxu0 %v32
  %v274 = vpop.f32.mrb[0].mxu0
  %v275 = vadd.f32 0.0, %v274
  %v276 = vpop.f32.mrb[0].mxu0
  %v277 = vadd.f32 0.0, %v276
  %278 = vmatprep.mubr.f32.mxu0 0.0
  %279 = vmatmul.mubr.f32.gmra.mrb[0].mxu0 %v33
  %v280 = vpop.f32.mrb[0].mxu0
  %v281 = vadd.f32 0.0, %v280
  %v282 = vpop.f32.mrb[0].mxu0
  %v283 = vadd.f32 0.0, %v282
  %284 = vmatprep.mubr.f32.mxu0 0.0
  %285 = vmatmul.mubr.f32.gmra.mrb[0].mxu0 %v34
  %v286 = vpop.f32.mrb[0].mxu0
  %v287 = vadd.f32 0.0, %v286
  %v288 = vpop.f32.mrb[0].mxu0
  %v289 = vadd.f32 0.0, %v288
  %290 = vmatprep.mubr.f32.mxu0 0.0
  %291 = vmatmul.mubr.f32.gmra.mrb[0].mxu0 %v35
  %v292 = vpop.f32.mrb[0].mxu0
  %v293 = vadd.f32 0.0, %v292
  %v294 = vpop.f32.mrb[0].mxu0
  %v295 = vadd.f32 0.0, %v294
  %296 = vmatprep.mubr.f32.mxu0 0.0
  %297 = vmatmul.mubr.f32.gmra.mrb[0].mxu0 %v36
  %v298 = vpop.f32.mrb[0].mxu0
  %v299 = vadd.f32 0.0, %v298
  %v300 = vpop.f32.mrb[0].mxu0
  %v301 = vadd.f32 0.0, %v300
  %302 = vmatprep.mubr.f32.mxu0 0.0
  %303 = vmatmul.mubr.f32.gmra.mrb[0].mxu0 %v37
  %v304 = vpop.f32.mrb[0].mxu0
  %v305 = vadd.f32 0.0, %v304
  %v306 = vpop.f32.mrb[0].mxu0
  %v307 = vadd.f32 0.0, %v306
  %308 = vmatprep.mubr.f32.mxu0 0.0
  %309 = vmatmul.mubr.f32.gmra.mrb[0].mxu0 %v38
  %v310 = vpop.f32.mrb[0].mxu0
  %v311 = vadd.f32 0.0, %v310
  %v312 = vpop.f32.mrb[0].mxu0
  %v313 = vadd.f32 0.0, %v312
  %314 = vmatprep.mubr.f32.mxu0 0.0
  %315 = vmatmul.mubr.f32.gmra.mrb[0].mxu0 %v39
  %v316 = vpop.f32.mrb[0].mxu0
  %v317 = vadd.f32 0.0, %v316
  %v318 = vpop.f32.mrb[0].mxu0
  %v319 = vadd.f32 0.0, %v318
  %320 = vmatprep.mubr.f32.mxu0 0.0
  %321 = vmatmul.mubr.f32.gmra.mrb[0].mxu0 %v40
  %v322 = vpop.f32.mrb[0].mxu0
  %v323 = vadd.f32 0.0, %v322
  %v324 = vpop.f32.mrb[0].mxu0
  %v325 = vadd.f32 0.0, %v324
  %326 = vmatprep.mubr.f32.mxu0 0.0
  %327 = vmatmul.mubr.f32.gmra.mrb[0].mxu0 %v41
  %v328 = vpop.f32.mrb[0].mxu0
  %v329 = vadd.f32 0.0, %v328
  %v330 = vpop.f32.mrb[0].mxu0
  %v331 = vadd.f32 0.0, %v330
  %332 = vdwg.mxu0
  %v333 = vxor.u32 %v143, 2147483648
  %v334 = vxor.u32 %v145, 2147483648
  %v335 = vxor.u32 %v149, 2147483648
  %v336 = vxor.u32 %v151, 2147483648
  %v337 = vxor.u32 %v155, 2147483648
  %v338 = vxor.u32 %v157, 2147483648
  %v339 = vxor.u32 %v161, 2147483648
  %v340 = vxor.u32 %v163, 2147483648
  %v341 = vxor.u32 %v167, 2147483648
  %v342 = vxor.u32 %v169, 2147483648
  %v343 = vxor.u32 %v173, 2147483648
  %v344 = vxor.u32 %v175, 2147483648
  %v345 = vxor.u32 %v179, 2147483648
  %v346 = vxor.u32 %v181, 2147483648
  %v347 = vxor.u32 %v185, 2147483648
  %v348 = vxor.u32 %v187, 2147483648
  %v349 = vxor.u32 %v191, 2147483648
  %v350 = vxor.u32 %v193, 2147483648
  %v351 = vxor.u32 %v197, 2147483648
  %v352 = vxor.u32 %v199, 2147483648
  %v353 = vxor.u32 %v203, 2147483648
  %v354 = vxor.u32 %v205, 2147483648
  %v355 = vxor.u32 %v209, 2147483648
  %v356 = vxor.u32 %v211, 2147483648
  %v357 = vxor.u32 %v215, 2147483648
  %v358 = vxor.u32 %v217, 2147483648
  %v359 = vxor.u32 %v221, 2147483648
  %v360 = vxor.u32 %v223, 2147483648
  %v361 = vxor.u32 %v227, 2147483648
  %v362 = vxor.u32 %v229, 2147483648
  %v363 = vxor.u32 %v233, 2147483648
  %v364 = vxor.u32 %v235, 2147483648
  %v365 = vxor.u32 %v239, 2147483648
  %v366 = vxor.u32 %v241, 2147483648
  %v367 = vxor.u32 %v245, 2147483648
  %v368 = vxor.u32 %v247, 2147483648
  %v369 = vxor.u32 %v251, 2147483648
  %v370 = vxor.u32 %v253, 2147483648
  %v371 = vxor.u32 %v257, 2147483648
  %v372 = vxor.u32 %v259, 2147483648
  %v373 = vxor.u32 %v263, 2147483648
  %v374 = vxor.u32 %v265, 2147483648
  %v375 = vxor.u32 %v269, 2147483648
  %v376 = vxor.u32 %v271, 2147483648
  %v377 = vxor.u32 %v275, 2147483648
  %v378 = vxor.u32 %v277, 2147483648
  %v379 = vxor.u32 %v281, 2147483648
  %v380 = vxor.u32 %v283, 2147483648
  %v381 = vxor.u32 %v287, 2147483648
  %v382 = vxor.u32 %v289, 2147483648
  %v383 = vxor.u32 %v293, 2147483648
  %v384 = vxor.u32 %v295, 2147483648
  %v385 = vxor.u32 %v299, 2147483648
  %v386 = vxor.u32 %v301, 2147483648
  %v387 = vxor.u32 %v305, 2147483648
  %v388 = vxor.u32 %v307, 2147483648
  %v389 = vxor.u32 %v311, 2147483648
  %v390 = vxor.u32 %v313, 2147483648
  %v391 = vxor.u32 %v317, 2147483648
  %v392 = vxor.u32 %v319, 2147483648
  %v393 = vxor.u32 %v323, 2147483648
  %v394 = vxor.u32 %v325, 2147483648
  %v395 = vxor.u32 %v329, 2147483648
  %v396 = vxor.u32 %v331, 2147483648
  %v397 = vmul.f32 %v333, 1.442695
  %v398 = vpow.pop %v397
  %v399 = vmul.f32 %v334, 1.442695
  %v400 = vpow.pop %v399
  %v401 = vmul.f32 %v335, 1.442695
  %v402 = vpow.pop %v401
  %v403 = vmul.f32 %v336, 1.442695
  %v404 = vpow.pop %v403
  %v405 = vmul.f32 %v337, 1.442695
  %v406 = vpow.pop %v405
  %v407 = vmul.f32 %v338, 1.442695
  %v408 = vpow.pop %v407
  %v409 = vmul.f32 %v339, 1.442695
  %v410 = vpow.pop %v409
  %v411 = vmul.f32 %v340, 1.442695
  %v412 = vpow.pop %v411
  %v413 = vmul.f32 %v341, 1.442695
  %v414 = vpow.pop %v413
  %v415 = vmul.f32 %v342, 1.442695
  %v416 = vpow.pop %v415
  %v417 = vmul.f32 %v343, 1.442695
  %v418 = vpow.pop %v417
  %v419 = vmul.f32 %v344, 1.442695
  %v420 = vpow.pop %v419
  %v421 = vmul.f32 %v345, 1.442695
  %v422 = vpow.pop %v421
  %v423 = vmul.f32 %v346, 1.442695
  %v424 = vpow.pop %v423
  %v425 = vmul.f32 %v347, 1.442695
  %v426 = vpow.pop %v425
  %v427 = vmul.f32 %v348, 1.442695
  %v428 = vpow.pop %v427
  %v429 = vmul.f32 %v349, 1.442695
  %v430 = vpow.pop %v429
  %v431 = vmul.f32 %v350, 1.442695
  %v432 = vpow.pop %v431
  %v433 = vmul.f32 %v351, 1.442695
  %v434 = vpow.pop %v433
  %v435 = vmul.f32 %v352, 1.442695
  %v436 = vpow.pop %v435
  %v437 = vmul.f32 %v353, 1.442695
  %v438 = vpow.pop %v437
  %v439 = vmul.f32 %v354, 1.442695
  %v440 = vpow.pop %v439
  %v441 = vmul.f32 %v355, 1.442695
  %v442 = vpow.pop %v441
  %v443 = vmul.f32 %v356, 1.442695
  %v444 = vpow.pop %v443
  %v445 = vmul.f32 %v357, 1.442695
  %v446 = vpow.pop %v445
  %v447 = vmul.f32 %v358, 1.442695
  %v448 = vpow.pop %v447
  %v449 = vmul.f32 %v359, 1.442695
  %v450 = vpow.pop %v449
  %v451 = vmul.f32 %v360, 1.442695
  %v452 = vpow.pop %v451
  %v453 = vmul.f32 %v361, 1.442695
  %v454 = vpow.pop %v453
  %v455 = vmul.f32 %v362, 1.442695
  %v456 = vpow.pop %v455
  %v457 = vmul.f32 %v363, 1.442695
  %v458 = vpow.pop %v457
  %v459 = vmul.f32 %v364, 1.442695
  %v460 = vpow.pop %v459
  %v461 = vmul.f32 %v365, 1.442695
  %v462 = vpow.pop %v461
  %v463 = vmul.f32 %v366, 1.442695
  %v464 = vpow.pop %v463
  %v465 = vmul.f32 %v367, 1.442695
  %v466 = vpow.pop %v465
  %v467 = vmul.f32 %v368, 1.442695
  %v468 = vpow.pop %v467
  %v469 = vmul.f32 %v369, 1.442695
  %v470 = vpow.pop %v469
  %v471 = vmul.f32 %v370, 1.442695
  %v472 = vpow.pop %v471
  %v473 = vmul.f32 %v371, 1.442695
  %v474 = vpow.pop %v473
  %v475 = vmul.f32 %v372, 1.442695
  %v476 = vpow.pop %v475
  %v477 = vmul.f32 %v373, 1.442695
  %v478 = vpow.pop %v477
  %v479 = vmul.f32 %v374, 1.442695
  %v480 = vpow.pop %v479
  %v481 = vmul.f32 %v375, 1.442695
  %v482 = vpow.pop %v481
  %v483 = vmul.f32 %v376, 1.442695
  %v484 = vpow.pop %v483
  %v485 = vmul.f32 %v377, 1.442695
  %v486 = vpow.pop %v485
  %v487 = vmul.f32 %v378, 1.442695
  %v488 = vpow.pop %v487
  %v489 = vmul.f32 %v379, 1.442695
  %v490 = vpow.pop %v489
  %v491 = vmul.f32 %v380, 1.442695
  %v492 = vpow.pop %v491
  %v493 = vmul.f32 %v381, 1.442695
  %v494 = vpow.pop %v493
  %v495 = vmul.f32 %v382, 1.442695
  %v496 = vpow.pop %v495
  %v497 = vmul.f32 %v383, 1.442695
  %v498 = vpow.pop %v497
  %v499 = vmul.f32 %v384, 1.442695
  %v500 = vpow.pop %v499
  %v501 = vmul.f32 %v385, 1.442695
  %v502 = vpow.pop %v501
  %v503 = vmul.f32 %v386, 1.442695
  %v504 = vpow.pop %v503
  %v505 = vmul.f32 %v387, 1.442695
  %v506 = vpow.pop %v505
  %v507 = vmul.f32 %v388, 1.442695
  %v508 = vpow.pop %v507
  %v509 = vmul.f32 %v389, 1.442695
  %v510 = vpow.pop %v509
  %v511 = vmul.f32 %v390, 1.442695
  %v512 = vpow.pop %v511
  %v513 = vmul.f32 %v391, 1.442695
  %v514 = vpow.pop %v513
  %v515 = vmul.f32 %v392, 1.442695
  %v516 = vpow.pop %v515
  %v517 = vmul.f32 %v393, 1.442695
  %v518 = vpow.pop %v517
  %v519 = vmul.f32 %v394, 1.442695
  %v520 = vpow.pop %v519
  %v521 = vmul.f32 %v395, 1.442695
  %v522 = vpow.pop %v521
  %v523 = vmul.f32 %v396, 1.442695
  %v524 = vpow.pop %v523
  %v525 = vadd.f32 %v398, 1.0
  %v526 = vadd.f32 %v400, 1.0
  %v527 = vadd.f32 %v402, 1.0
  %v528 = vadd.f32 %v404, 1.0
  %v529 = vadd.f32 %v406, 1.0
  %v530 = vadd.f32 %v408, 1.0
  %v531 = vadd.f32 %v410, 1.0
  %v532 = vadd.f32 %v412, 1.0
  %v533 = vadd.f32 %v414, 1.0
  %v534 = vadd.f32 %v416, 1.0
  %v535 = vadd.f32 %v418, 1.0
  %v536 = vadd.f32 %v420, 1.0
  %v537 = vadd.f32 %v422, 1.0
  %v538 = vadd.f32 %v424, 1.0
  %v539 = vadd.f32 %v426, 1.0
  %v540 = vadd.f32 %v428, 1.0
  %v541 = vadd.f32 %v430, 1.0
  %v542 = vadd.f32 %v432, 1.0
  %v543 = vadd.f32 %v434, 1.0
  %v544 = vadd.f32 %v436, 1.0
  %v545 = vadd.f32 %v438, 1.0
  %v546 = vadd.f32 %v440, 1.0
  %v547 = vadd.f32 %v442, 1.0
  %v548 = vadd.f32 %v444, 1.0
  %v549 = vadd.f32 %v446, 1.0
  %v550 = vadd.f32 %v448, 1.0
  %v551 = vadd.f32 %v450, 1.0
  %v552 = vadd.f32 %v452, 1.0
  %v553 = vadd.f32 %v454, 1.0
  %v554 = vadd.f32 %v456, 1.0
  %v555 = vadd.f32 %v458, 1.0
  %v556 = vadd.f32 %v460, 1.0
  %v557 = vadd.f32 %v462, 1.0
  %v558 = vadd.f32 %v464, 1.0
  %v559 = vadd.f32 %v466, 1.0
  %v560 = vadd.f32 %v468, 1.0
  %v561 = vadd.f32 %v470, 1.0
  %v562 = vadd.f32 %v472, 1.0
  %v563 = vadd.f32 %v474, 1.0
  %v564 = vadd.f32 %v476, 1.0
  %v565 = vadd.f32 %v478, 1.0
  %v566 = vadd.f32 %v480, 1.0
  %v567 = vadd.f32 %v482, 1.0
  %v568 = vadd.f32 %v484, 1.0
  %v569 = vadd.f32 %v486, 1.0
  %v570 = vadd.f32 %v488, 1.0
  %v571 = vadd.f32 %v490, 1.0
  %v572 = vadd.f32 %v492, 1.0
  %v573 = vadd.f32 %v494, 1.0
  %v574 = vadd.f32 %v496, 1.0
  %v575 = vadd.f32 %v498, 1.0
  %v576 = vadd.f32 %v500, 1.0
  %v577 = vadd.f32 %v502, 1.0
  %v578 = vadd.f32 %v504, 1.0
  %v579 = vadd.f32 %v506, 1.0
  %v580 = vadd.f32 %v508, 1.0
  %v581 = vadd.f32 %v510, 1.0
  %v582 = vadd.f32 %v512, 1.0
  %v583 = vadd.f32 %v514, 1.0
  %v584 = vadd.f32 %v516, 1.0
  %v585 = vadd.f32 %v518, 1.0
  %v586 = vadd.f32 %v520, 1.0
  %v587 = vadd.f32 %v522, 1.0
  %v588 = vadd.f32 %v524, 1.0
  %v589 = vrcp.pop %v525
  %v590 = vmul.f32 1.0, %v589
  %v591 = vrcp.pop %v526
  %v592 = vmul.f32 1.0, %v591
  %v593 = vrcp.pop %v527
  %v594 = vmul.f32 1.0, %v593
  %v595 = vrcp.pop %v528
  %v596 = vmul.f32 1.0, %v595
  %v597 = vrcp.pop %v529
  %v598 = vmul.f32 1.0, %v597
  %v599 = vrcp.pop %v530
  %v600 = vmul.f32 1.0, %v599
  %v601 = vrcp.pop %v531
  %v602 = vmul.f32 1.0, %v601
  %v603 = vrcp.pop %v532
  %v604 = vmul.f32 1.0, %v603
  %v605 = vrcp.pop %v533
  %v606 = vmul.f32 1.0, %v605
  %v607 = vrcp.pop %v534
  %v608 = vmul.f32 1.0, %v607
  %v609 = vrcp.pop %v535
  %v610 = vmul.f32 1.0, %v609
  %v611 = vrcp.pop %v536
  %v612 = vmul.f32 1.0, %v611
  %v613 = vrcp.pop %v537
  %v614 = vmul.f32 1.0, %v613
  %v615 = vrcp.pop %v538
  %v616 = vmul.f32 1.0, %v615
  %v617 = vrcp.pop %v539
  %v618 = vmul.f32 1.0, %v617
  %v619 = vrcp.pop %v540
  %v620 = vmul.f32 1.0, %v619
  %v621 = vrcp.pop %v541
  %v622 = vmul.f32 1.0, %v621
  %v623 = vrcp.pop %v542
  %v624 = vmul.f32 1.0, %v623
  %v625 = vrcp.pop %v543
  %v626 = vmul.f32 1.0, %v625
  %v627 = vrcp.pop %v544
  %v628 = vmul.f32 1.0, %v627
  %v629 = vrcp.pop %v545
  %v630 = vmul.f32 1.0, %v629
  %v631 = vrcp.pop %v546
  %v632 = vmul.f32 1.0, %v631
  %v633 = vrcp.pop %v547
  %v634 = vmul.f32 1.0, %v633
  %v635 = vrcp.pop %v548
  %v636 = vmul.f32 1.0, %v635
  %v637 = vrcp.pop %v549
  %v638 = vmul.f32 1.0, %v637
  %v639 = vrcp.pop %v550
  %v640 = vmul.f32 1.0, %v639
  %v641 = vrcp.pop %v551
  %v642 = vmul.f32 1.0, %v641
  %v643 = vrcp.pop %v552
  %v644 = vmul.f32 1.0, %v643
  %v645 = vrcp.pop %v553
  %v646 = vmul.f32 1.0, %v645
  %v647 = vrcp.pop %v554
  %v648 = vmul.f32 1.0, %v647
  %v649 = vrcp.pop %v555
  %v650 = vmul.f32 1.0, %v649
  %v651 = vrcp.pop %v556
  %v652 = vmul.f32 1.0, %v651
  %v653 = vrcp.pop %v557
  %v654 = vmul.f32 1.0, %v653
  %v655 = vrcp.pop %v558
  %v656 = vmul.f32 1.0, %v655
  %v657 = vrcp.pop %v559
  %v658 = vmul.f32 1.0, %v657
  %v659 = vrcp.pop %v560
  %v660 = vmul.f32 1.0, %v659
  %v661 = vrcp.pop %v561
  %v662 = vmul.f32 1.0, %v661
  %v663 = vrcp.pop %v562
  %v664 = vmul.f32 1.0, %v663
  %v665 = vrcp.pop %v563
  %v666 = vmul.f32 1.0, %v665
  %v667 = vrcp.pop %v564
  %v668 = vmul.f32 1.0, %v667
  %v669 = vrcp.pop %v565
  %v670 = vmul.f32 1.0, %v669
  %v671 = vrcp.pop %v566
  %v672 = vmul.f32 1.0, %v671
  %v673 = vrcp.pop %v567
  %v674 = vmul.f32 1.0, %v673
  %v675 = vrcp.pop %v568
  %v676 = vmul.f32 1.0, %v675
  %v677 = vrcp.pop %v569
  %v678 = vmul.f32 1.0, %v677
  %v679 = vrcp.pop %v570
  %v680 = vmul.f32 1.0, %v679
  %v681 = vrcp.pop %v571
  %v682 = vmul.f32 1.0, %v681
  %v683 = vrcp.pop %v572
  %v684 = vmul.f32 1.0, %v683
  %v685 = vrcp.pop %v573
  %v686 = vmul.f32 1.0, %v685
  %v687 = vrcp.pop %v574
  %v688 = vmul.f32 1.0, %v687
  %v689 = vrcp.pop %v575
  %v690 = vmul.f32 1.0, %v689
  %v691 = vrcp.pop %v576
  %v692 = vmul.f32 1.0, %v691
  %v693 = vrcp.pop %v577
  %v694 = vmul.f32 1.0, %v693
  %v695 = vrcp.pop %v578
  %v696 = vmul.f32 1.0, %v695
  %v697 = vrcp.pop %v579
  %v698 = vmul.f32 1.0, %v697
  %v699 = vrcp.pop %v580
  %v700 = vmul.f32 1.0, %v699
  %v701 = vrcp.pop %v581
  %v702 = vmul.f32 1.0, %v701
  %v703 = vrcp.pop %v582
  %v704 = vmul.f32 1.0, %v703
  %v705 = vrcp.pop %v583
  %v706 = vmul.f32 1.0, %v705
  %v707 = vrcp.pop %v584
  %v708 = vmul.f32 1.0, %v707
  %v709 = vrcp.pop %v585
  %v710 = vmul.f32 1.0, %v709
  %v711 = vrcp.pop %v586
  %v712 = vmul.f32 1.0, %v711
  %v713 = vrcp.pop %v587
  %v714 = vmul.f32 1.0, %v713
  %v715 = vrcp.pop %v588
  %v716 = vmul.f32 1.0, %v715
  %717 = vst [vmem:[%s1] sm:$0xff] %v590
  %718 = vst [vmem:[%s1 + $0x8] sm:$0xff] %v592
  %719 = vst [vmem:[%s1 + $0x10] sm:$0xff] %v594
  %720 = vst [vmem:[%s1 + $0x18] sm:$0xff] %v596
  %721 = vst [vmem:[%s1 + $0x20] sm:$0xff] %v598
  %722 = vst [vmem:[%s1 + $0x28] sm:$0xff] %v600
  %723 = vst [vmem:[%s1 + $0x30] sm:$0xff] %v602
  %724 = vst [vmem:[%s1 + $0x38] sm:$0xff] %v604
  %725 = vst [vmem:[%s1 + $0x40] sm:$0xff] %v606
  %726 = vst [vmem:[%s1 + $0x48] sm:$0xff] %v608
  %727 = vst [vmem:[%s1 + $0x50] sm:$0xff] %v610
  %728 = vst [vmem:[%s1 + $0x58] sm:$0xff] %v612
  %729 = vst [vmem:[%s1 + $0x60] sm:$0xff] %v614
  %730 = vst [vmem:[%s1 + $0x68] sm:$0xff] %v616
  %731 = vst [vmem:[%s1 + $0x70] sm:$0xff] %v618
  %732 = vst [vmem:[%s1 + $0x78] sm:$0xff] %v620
  %733 = vst [vmem:[%s1 + $0x80] sm:$0xff] %v622
  %734 = vst [vmem:[%s1 + $0x88] sm:$0xff] %v624
  %735 = vst [vmem:[%s1 + $0x90] sm:$0xff] %v626
  %736 = vst [vmem:[%s1 + $0x98] sm:$0xff] %v628
  %737 = vst [vmem:[%s1 + $0xa0] sm:$0xff] %v630
  %738 = vst [vmem:[%s1 + $0xa8] sm:$0xff] %v632
  %739 = vst [vmem:[%s1 + $0xb0] sm:$0xff] %v634
  %740 = vst [vmem:[%s1 + $0xb8] sm:$0xff] %v636
  %741 = vst [vmem:[%s1 + $0xc0] sm:$0xff] %v638
  %742 = vst [vmem:[%s1 + $0xc8] sm:$0xff] %v640
  %743 = vst [vmem:[%s1 + $0xd0] sm:$0xff] %v642
  %744 = vst [vmem:[%s1 + $0xd8] sm:$0xff] %v644
  %745 = vst [vmem:[%s1 + $0xe0] sm:$0xff] %v646
  %746 = vst [vmem:[%s1 + $0xe8] sm:$0xff] %v648
  %747 = vst [vmem:[%s1 + $0xf0] sm:$0xff] %v650
  %748 = vst [vmem:[%s1 + $0xf8] sm:$0xff] %v652
  %749 = vst [vmem:[%s1 + $0x100] sm:$0xff] %v654
  %750 = vst [vmem:[%s1 + $0x108] sm:$0xff] %v656
  %751 = vst [vmem:[%s1 + $0x110] sm:$0xff] %v658
  %752 = vst [vmem:[%s1 + $0x118] sm:$0xff] %v660
  %753 = vst [vmem:[%s1 + $0x120] sm:$0xff] %v662
  %754 = vst [vmem:[%s1 + $0x128] sm:$0xff] %v664
  %755 = vst [vmem:[%s1 + $0x130] sm:$0xff] %v666
  %756 = vst [vmem:[%s1 + $0x138] sm:$0xff] %v668
  %757 = vst [vmem:[%s1 + $0x140] sm:$0xff] %v670
  %758 = vst [vmem:[%s1 + $0x148] sm:$0xff] %v672
  %759 = vst [vmem:[%s1 + $0x150] sm:$0xff] %v674
  %760 = vst [vmem:[%s1 + $0x158] sm:$0xff] %v676
  %761 = vst [vmem:[%s1 + $0x160] sm:$0xff] %v678
  %762 = vst [vmem:[%s1 + $0x168] sm:$0xff] %v680
  %763 = vst [vmem:[%s1 + $0x170] sm:$0xff] %v682
  %764 = vst [vmem:[%s1 + $0x178] sm:$0xff] %v684
  %765 = vst [vmem:[%s1 + $0x180] sm:$0xff] %v686
  %766 = vst [vmem:[%s1 + $0x188] sm:$0xff] %v688
  %767 = vst [vmem:[%s1 + $0x190] sm:$0xff] %v690
  %768 = vst [vmem:[%s1 + $0x198] sm:$0xff] %v692
  %769 = vst [vmem:[%s1 + $0x1a0] sm:$0xff] %v694
  %770 = vst [vmem:[%s1 + $0x1a8] sm:$0xff] %v696
  %771 = vst [vmem:[%s1 + $0x1b0] sm:$0xff] %v698
  %772 = vst [vmem:[%s1 + $0x1b8] sm:$0xff] %v700
  %773 = vst [vmem:[%s1 + $0x1c0] sm:$0xff] %v702
  %774 = vst [vmem:[%s1 + $0x1c8] sm:$0xff] %v704
  %775 = vst [vmem:[%s1 + $0x1d0] sm:$0xff] %v706
  %776 = vst [vmem:[%s1 + $0x1d8] sm:$0xff] %v708
  %777 = vst [vmem:[%s1 + $0x1e0] sm:$0xff] %v710
  %778 = vst [vmem:[%s1 + $0x1e8] sm:$0xff] %v712
  %779 = vst [vmem:[%s1 + $0x1f0] sm:$0xff] %v714
  %780 = vst [vmem:[%s1 + $0x1f8] sm:$0xff] %v716
  // Predicated region
  $region6: #{gae_forward.9} parent=0 // pred_check
    _
  $region7: #{gae_forward.9} parent=0 // pred_check_branch
    %782 = sbr.rel (0) target = $region9
  $region8: #{gae_forward.9} parent=0 // pred_region
    _
  $region9: #{gae_forward.9} parent=0 // pred_fallthru
    _
  // Predicated region
  $region10: #{gae_forward.9} parent=0 // pred_check
    _
  $region11: #{gae_forward.9} parent=0 // pred_check_branch
    %784 = sbr.rel (0) target = $region13
  $region12: #{gae_forward.9} parent=0 // pred_region
    _
  $region13: #{gae_forward.9} parent=0 // pred_fallthru
    _

</llo_original>
